<compile_context>
chip_gen: v7x
topology: tpu7x:2x2x1
jax: 0.10.0
libtpu: 0.0.40
codegen_flags: <defaults>
</compile_context>

<pallas_src>
import numpy as np
import jax
import jax.numpy as jnp
from jax.experimental import pallas as pl
from jax.experimental.pallas import tpu as pltpu

# ---- problem sizes (small, consistent with the module's ResBlock forward) ----
B, C, H, W = 2, 8, 16, 16      # batch, n_channel, spatial  (module uses 64 ch; kept small here)
K = 3                          # kernel_size
PAD = K // 2                   # "same" padding (default_conv)
N_BLOCKS = 2                   # branch_guide stacks two ResBlock(conv, n, 3)
NCONV = 2 * N_BLOCKS           # total 3x3 convs in the stack
WC = W * C                     # lane-dense width  = 128
M = B * H                      # matmul M dimension (batch folded into rows) = 32


def resblocks_kernel(x_ref, w_ref, b_ref, out_ref):
    """All N_BLOCKS ResBlocks in one grid step, fully lane-dense.

    x_ref  : (M, WC)               lane-dense activations, batch folded into rows
    w_ref  : (NCONV*K, WC, WC)     block-banded weights, one (128,128) matrix per (conv, kh)
    b_ref  : (NCONV, 1, WC)        lane-broadcast biases
    out_ref: (M, WC)
    """
    a = x_ref[...]                                        # (32, 128) f32

    # Row-validity masks for the "same" padding along H.  (The W padding is already encoded as
    # zero bands inside the banded weight matrices.)
    row = jax.lax.broadcasted_iota(jnp.int32, (M, WC), 0)
    not_first = (row % H) != 0                            # row h has an in-image neighbour h-1
    not_last = (row % H) != (H - 1)                       # row h has an in-image neighbour h+1

    def conv3x3(v, cid):
        # v[h-1] / v[h+1] operands: sublane roll (XLU) + zero-mask at batch/image boundaries.
        v_up = jnp.where(not_first, pltpu.roll(v, shift=1, axis=0), 0.0)       # v[h-1]
        v_dn = jnp.where(not_last, pltpu.roll(v, shift=M - 1, axis=0), 0.0)    # v[h+1]
        base = cid * K
        acc = jnp.dot(v_up, w_ref[base + 0], preferred_element_type=jnp.float32)
        acc = acc + jnp.dot(v, w_ref[base + 1], preferred_element_type=jnp.float32)
        acc = acc + jnp.dot(v_dn, w_ref[base + 2], preferred_element_type=jnp.float32)
        return acc + b_ref[cid]                           # (1, WC) broadcast over rows

    for blk in range(N_BLOCKS):                           # short static unroll over the stack
        mid = jnp.maximum(conv3x3(a, 2 * blk), 0.0)       # conv1 + ReLU
        a = conv3x3(mid, 2 * blk + 1) + a                 # conv2 + residual
    out_ref[...] = a.astype(out_ref.dtype)


def resblocks_lane_dense(x_nchw, w_banded, b_bcast):
    """x_nchw: (B, C, H, W) float32 -> (B, C, H, W) after N_BLOCKS stacked ResBlocks."""
    # Lane-dense presentation (wrapper-side layout plumbing): (B*H, W*C) = (32, 128).
    x2d = jnp.transpose(x_nchw, (0, 2, 3, 1)).reshape(M, WC)
    out2d = pl.pallas_call(
        resblocks_kernel,
        out_shape=jax.ShapeDtypeStruct((M, WC), x_nchw.dtype),
        grid_spec=pltpu.PrefetchScalarGridSpec(
            num_scalar_prefetch=0,
            grid=(1,),                                    # single step: batch + all blocks fused
            in_specs=[
                pl.BlockSpec((M, WC), lambda i: (0, 0)),
                pl.BlockSpec((NCONV * K, WC, WC), lambda i: (0, 0, 0)),
                pl.BlockSpec((NCONV, 1, WC), lambda i: (0, 0, 0)),
            ],
            out_specs=pl.BlockSpec((M, WC), lambda i: (0, 0)),
        ),
        compiler_params=pltpu.CompilerParams(
            dimension_semantics=("arbitrary",)),
    )(x2d, w_banded, b_bcast)
    return jnp.transpose(out2d.reshape(B, H, W, C), (0, 3, 1, 2))


# ---- host-side constant preparation ----
def _banded_from_hwio(w_hwio):
    """(K, K, Cin, Cout) 'same'-padding conv weight -> (K, W*Cin, W*Cout) block-banded matrices."""
    mats = np.zeros((K, WC, WC), np.float32)
    for kh in range(K):
        for kw in range(K):
            dw = kw - PAD                                 # source column offset
            for wo in range(W):
                wi = wo + dw
                if 0 <= wi < W:
                    mats[kh, wi * C:(wi + 1) * C, wo * C:(wo + 1) * C] = w_hwio[kh, kw]
    return mats


def prepare_params(torch_params):
    """torch_params: list of N_BLOCKS tuples (w1, b1, w2, b2), weights in PyTorch
    (Cout, Cin, KH, KW) layout.  Returns (w_banded, b_bcast) kernel constants."""
    w_mats, b_rows = [], []
    for (w1, b1, w2, b2) in torch_params:
        for w, b in ((w1, b1), (w2, b2)):
            w_hwio = np.transpose(np.asarray(w), (2, 3, 1, 0))        # (KH, KW, Cin, Cout)
            w_mats.append(_banded_from_hwio(w_hwio))                  # (K, WC, WC)
            b_rows.append(np.tile(np.asarray(b), W).reshape(1, WC))   # lane-broadcast bias
    w_all = np.concatenate(w_mats, axis=0)                            # (NCONV*K, WC, WC)
    b_all = np.stack(b_rows)                                          # (NCONV, 1, WC)
    return jnp.asarray(w_all), jnp.asarray(b_all)


# ---- pure-JAX reference (same forward semantics: conv -> ReLU -> conv -> += x, stacked) ----
def _conv_ref(x_nhwc, w_hwio, b):
    y = jax.lax.conv_general_dilated(
        x_nhwc, w_hwio, window_strides=(1, 1), padding="SAME",
        dimension_numbers=("NHWC", "HWIO", "NHWC"))
    return y + b.reshape(1, 1, 1, C)


def _resblocks_ref(x_nhwc, torch_params):
    a = x_nhwc
    for (w1, b1, w2, b2) in torch_params:
        w1_hwio = jnp.transpose(w1, (2, 3, 1, 0))
        w2_hwio = jnp.transpose(w2, (2, 3, 1, 0))
        mid = jnp.maximum(_conv_ref(a, w1_hwio, b1), 0.0)
        a = _conv_ref(mid, w2_hwio, b2) + a
    return a


if __name__ == "__main__":
    key = jax.random.PRNGKey(0)
    keys = jax.random.split(key, 1 + 4 * N_BLOCKS)

    # Input in PyTorch NCHW convention.
    x_nchw = jax.random.normal(keys[0], (B, C, H, W), jnp.float32)

    # Deterministic synthetic parameters in PyTorch conv layout (Cout, Cin, KH, KW).
    torch_params = []
    for blk in range(N_BLOCKS):
        k1, k2, k3, k4 = keys[1 + 4 * blk: 5 + 4 * blk]
        w1 = 0.1 * jax.random.normal(k1, (C, C, K, K), jnp.float32)
        b1 = 0.1 * jax.random.normal(k2, (C,), jnp.float32)
        w2 = 0.1 * jax.random.normal(k3, (C, C, K, K), jnp.float32)
        b2 = 0.1 * jax.random.normal(k4, (C,), jnp.float32)
        torch_params.append((w1, b1, w2, b2))

    w_banded, b_bcast = prepare_params(torch_params)

    out_nchw = resblocks_lane_dense(x_nchw, w_banded, b_bcast)
    jax.block_until_ready(out_nchw)

    x_nhwc = jnp.transpose(x_nchw, (0, 2, 3, 1))
    ref_nchw = jnp.transpose(_resblocks_ref(x_nhwc, torch_params), (0, 3, 1, 2))

    assert jnp.allclose(out_nchw, ref_nchw, atol=1e-3, rtol=1e-3), \
        "Pallas ResBlock-stack output mismatch vs reference"
    print("KERNEL_OK")
</pallas_src>

<mosaic_0001>
module attributes {stable_mosaic.version = 11 : i64} {
  func.func @resblocks_kernel(%arg0: i32, %arg1: memref<32x128xf32, #tpu.memory_space<vmem>>, %arg2: memref<12x128x128xf32, #tpu.memory_space<vmem>>, %arg3: memref<4x1x128xf32, #tpu.memory_space<vmem>>, %arg4: memref<32x128xf32, #tpu.memory_space<vmem>>) attributes {dimension_semantics = [#tpu.dimension_semantics<arbitrary>], iteration_bounds = array<i64: 1>, scalar_prefetch = 0 : i64, scratch_operands = 0 : i64, tpu.core_type = #tpu.core_type<tc>, window_params = [{pipeline_mode = #tpu.pipeline_mode<synchronous>, transform_indices = @transform_0, window_bounds = array<i64: 32, 128>}, {pipeline_mode = #tpu.pipeline_mode<synchronous>, transform_indices = @transform_1, window_bounds = array<i64: 12, 128, 128>}, {pipeline_mode = #tpu.pipeline_mode<synchronous>, transform_indices = @transform_2, window_bounds = array<i64: 4, 1, 128>}, {pipeline_mode = #tpu.pipeline_mode<synchronous>, transform_indices = @transform_3, window_bounds = array<i64: 32, 128>}]} {
    %c0 = arith.constant 0 : index
    %c0_0 = arith.constant 0 : index
    %0 = vector.load %arg1[%c0, %c0_0] : memref<32x128xf32, #tpu.memory_space<vmem>>, vector<32x128xf32>
    %1 = tpu.iota {dimensions = array<i32: 0>} : vector<32x128xi32>
    %c16_i32 = arith.constant 16 : i32
    %c0_i32 = arith.constant 0 : i32
    %2 = arith.cmpi eq, %c16_i32, %c0_i32 : i32
    %c1_i32 = arith.constant 1 : i32
    %3 = arith.select %2, %c1_i32, %c16_i32 : i32
    %4 = vector.broadcast %3 : i32 to vector<32x128xi32>
    %5 = arith.remsi %1, %4 : vector<32x128xi32>
    %c0_i32_1 = arith.constant 0 : i32
    %6 = vector.broadcast %c0_i32_1 : i32 to vector<32x128xi32>
    %7 = arith.cmpi ne, %5, %6 : vector<32x128xi32>
    %c0_i32_2 = arith.constant 0 : i32
    %8 = vector.broadcast %c0_i32_2 : i32 to vector<32x128xi32>
    %9 = arith.cmpi slt, %5, %8 : vector<32x128xi32>
    %c0_i32_3 = arith.constant 0 : i32
    %10 = arith.cmpi slt, %3, %c0_i32_3 : i32
    %11 = vector.broadcast %10 : i1 to vector<32x128xi1>
    %12 = vector.broadcast %11 : vector<32x128xi1> to vector<32x128xi1>
    %13 = arith.xori %9, %12 : vector<32x128xi1>
    %14 = arith.andi %13, %7 : vector<32x128xi1>
    %15 = vector.broadcast %3 : i32 to vector<32x128xi32>
    %16 = arith.addi %5, %15 : vector<32x128xi32>
    %17 = arith.select %14, %16, %5 : vector<32x128xi1>, vector<32x128xi32>
    %c0_i32_4 = arith.constant 0 : i32
    %18 = vector.broadcast %c0_i32_4 : i32 to vector<32x128xi32>
    %19 = arith.cmpi ne, %17, %18 : vector<32x128xi32>
    %c16_i32_5 = arith.constant 16 : i32
    %c0_i32_6 = arith.constant 0 : i32
    %20 = arith.cmpi eq, %c16_i32_5, %c0_i32_6 : i32
    %c1_i32_7 = arith.constant 1 : i32
    %21 = arith.select %20, %c1_i32_7, %c16_i32_5 : i32
    %22 = vector.broadcast %21 : i32 to vector<32x128xi32>
    %23 = arith.remsi %1, %22 : vector<32x128xi32>
    %c0_i32_8 = arith.constant 0 : i32
    %24 = vector.broadcast %c0_i32_8 : i32 to vector<32x128xi32>
    %25 = arith.cmpi ne, %23, %24 : vector<32x128xi32>
    %c0_i32_9 = arith.constant 0 : i32
    %26 = vector.broadcast %c0_i32_9 : i32 to vector<32x128xi32>
    %27 = arith.cmpi slt, %23, %26 : vector<32x128xi32>
    %c0_i32_10 = arith.constant 0 : i32
    %28 = arith.cmpi slt, %21, %c0_i32_10 : i32
    %29 = vector.broadcast %28 : i1 to vector<32x128xi1>
    %30 = vector.broadcast %29 : vector<32x128xi1> to vector<32x128xi1>
    %31 = arith.xori %27, %30 : vector<32x128xi1>
    %32 = arith.andi %31, %25 : vector<32x128xi1>
    %33 = vector.broadcast %21 : i32 to vector<32x128xi32>
    %34 = arith.addi %23, %33 : vector<32x128xi32>
    %35 = arith.select %32, %34, %23 : vector<32x128xi1>, vector<32x128xi32>
    %c15_i32 = arith.constant 15 : i32
    %36 = vector.broadcast %c15_i32 : i32 to vector<32x128xi32>
    %37 = arith.cmpi ne, %35, %36 : vector<32x128xi32>
    %c1_i32_11 = arith.constant 1 : i32
    %38 = tpu.dynamic_rotate %0 by %c1_i32_11 dim 0 : vector<32x128xf32>, i32 -> vector<32x128xf32>
    %cst = arith.constant 0.000000e+00 : f32
    %39 = vector.broadcast %cst : f32 to vector<32x128xf32>
    %40 = arith.select %19, %38, %39 : vector<32x128xi1>, vector<32x128xf32>
    %c31_i32 = arith.constant 31 : i32
    %41 = tpu.dynamic_rotate %0 by %c31_i32 dim 0 : vector<32x128xf32>, i32 -> vector<32x128xf32>
    %cst_12 = arith.constant 0.000000e+00 : f32
    %42 = vector.broadcast %cst_12 : f32 to vector<32x128xf32>
    %43 = arith.select %37, %41, %42 : vector<32x128xi1>, vector<32x128xf32>
    %c0_13 = arith.constant 0 : index
    %c0_14 = arith.constant 0 : index
    %c0_15 = arith.constant 0 : index
    %44 = vector.load %arg2[%c0_13, %c0_14, %c0_15] : memref<12x128x128xf32, #tpu.memory_space<vmem>>, vector<1x128x128xf32>
    %45 = vector.shape_cast %44 : vector<1x128x128xf32> to vector<128x128xf32>
    %cst_16 = arith.constant dense<0.000000e+00> : vector<32x128xf32>
    %46 = tpu.matmul %40, %45, %cst_16 {dimension_numbers = #tpu.dot_dimension_numbers<[1], [0], [0], [1], [0, 0, 1, 1], [], []>} : vector<32x128xf32>, vector<128x128xf32>, vector<32x128xf32> -> vector<32x128xf32>
    %c1 = arith.constant 1 : index
    %c0_17 = arith.constant 0 : index
    %c0_18 = arith.constant 0 : index
    %47 = vector.load %arg2[%c1, %c0_17, %c0_18] : memref<12x128x128xf32, #tpu.memory_space<vmem>>, vector<1x128x128xf32>
    %48 = vector.shape_cast %47 : vector<1x128x128xf32> to vector<128x128xf32>
    %cst_19 = arith.constant dense<0.000000e+00> : vector<32x128xf32>
    %49 = tpu.matmul %0, %48, %cst_19 {dimension_numbers = #tpu.dot_dimension_numbers<[1], [0], [0], [1], [0, 0, 1, 1], [], []>} : vector<32x128xf32>, vector<128x128xf32>, vector<32x128xf32> -> vector<32x128xf32>
    %50 = arith.addf %46, %49 : vector<32x128xf32>
    %c2 = arith.constant 2 : index
    %c0_20 = arith.constant 0 : index
    %c0_21 = arith.constant 0 : index
    %51 = vector.load %arg2[%c2, %c0_20, %c0_21] : memref<12x128x128xf32, #tpu.memory_space<vmem>>, vector<1x128x128xf32>
    %52 = vector.shape_cast %51 : vector<1x128x128xf32> to vector<128x128xf32>
    %cst_22 = arith.constant dense<0.000000e+00> : vector<32x128xf32>
    %53 = tpu.matmul %43, %52, %cst_22 {dimension_numbers = #tpu.dot_dimension_numbers<[1], [0], [0], [1], [0, 0, 1, 1], [], []>} : vector<32x128xf32>, vector<128x128xf32>, vector<32x128xf32> -> vector<32x128xf32>
    %54 = arith.addf %50, %53 : vector<32x128xf32>
    %c0_23 = arith.constant 0 : index
    %c0_24 = arith.constant 0 : index
    %c0_25 = arith.constant 0 : index
    %55 = vector.load %arg3[%c0_23, %c0_24, %c0_25] : memref<4x1x128xf32, #tpu.memory_space<vmem>>, vector<1x1x128xf32>
    %56 = vector.shape_cast %55 : vector<1x1x128xf32> to vector<1x128xf32>
    %57 = vector.broadcast %56 : vector<1x128xf32> to vector<32x128xf32>
    %58 = arith.addf %54, %57 : vector<32x128xf32>
    %cst_26 = arith.constant 0.000000e+00 : f32
    %59 = vector.broadcast %cst_26 : f32 to vector<32x128xf32>
    %60 = arith.maximumf %58, %59 : vector<32x128xf32>
    %c1_i32_27 = arith.constant 1 : i32
    %61 = tpu.dynamic_rotate %60 by %c1_i32_27 dim 0 : vector<32x128xf32>, i32 -> vector<32x128xf32>
    %cst_28 = arith.constant 0.000000e+00 : f32
    %62 = vector.broadcast %cst_28 : f32 to vector<32x128xf32>
    %63 = arith.select %19, %61, %62 : vector<32x128xi1>, vector<32x128xf32>
    %c31_i32_29 = arith.constant 31 : i32
    %64 = tpu.dynamic_rotate %60 by %c31_i32_29 dim 0 : vector<32x128xf32>, i32 -> vector<32x128xf32>
    %cst_30 = arith.constant 0.000000e+00 : f32
    %65 = vector.broadcast %cst_30 : f32 to vector<32x128xf32>
    %66 = arith.select %37, %64, %65 : vector<32x128xi1>, vector<32x128xf32>
    %c3 = arith.constant 3 : index
    %c0_31 = arith.constant 0 : index
    %c0_32 = arith.constant 0 : index
    %67 = vector.load %arg2[%c3, %c0_31, %c0_32] : memref<12x128x128xf32, #tpu.memory_space<vmem>>, vector<1x128x128xf32>
    %68 = vector.shape_cast %67 : vector<1x128x128xf32> to vector<128x128xf32>
    %cst_33 = arith.constant dense<0.000000e+00> : vector<32x128xf32>
    %69 = tpu.matmul %63, %68, %cst_33 {dimension_numbers = #tpu.dot_dimension_numbers<[1], [0], [0], [1], [0, 0, 1, 1], [], []>} : vector<32x128xf32>, vector<128x128xf32>, vector<32x128xf32> -> vector<32x128xf32>
    %c4 = arith.constant 4 : index
    %c0_34 = arith.constant 0 : index
    %c0_35 = arith.constant 0 : index
    %70 = vector.load %arg2[%c4, %c0_34, %c0_35] : memref<12x128x128xf32, #tpu.memory_space<vmem>>, vector<1x128x128xf32>
    %71 = vector.shape_cast %70 : vector<1x128x128xf32> to vector<128x128xf32>
    %cst_36 = arith.constant dense<0.000000e+00> : vector<32x128xf32>
    %72 = tpu.matmul %60, %71, %cst_36 {dimension_numbers = #tpu.dot_dimension_numbers<[1], [0], [0], [1], [0, 0, 1, 1], [], []>} : vector<32x128xf32>, vector<128x128xf32>, vector<32x128xf32> -> vector<32x128xf32>
    %73 = arith.addf %69, %72 : vector<32x128xf32>
    %c5 = arith.constant 5 : index
    %c0_37 = arith.constant 0 : index
    %c0_38 = arith.constant 0 : index
    %74 = vector.load %arg2[%c5, %c0_37, %c0_38] : memref<12x128x128xf32, #tpu.memory_space<vmem>>, vector<1x128x128xf32>
    %75 = vector.shape_cast %74 : vector<1x128x128xf32> to vector<128x128xf32>
    %cst_39 = arith.constant dense<0.000000e+00> : vector<32x128xf32>
    %76 = tpu.matmul %66, %75, %cst_39 {dimension_numbers = #tpu.dot_dimension_numbers<[1], [0], [0], [1], [0, 0, 1, 1], [], []>} : vector<32x128xf32>, vector<128x128xf32>, vector<32x128xf32> -> vector<32x128xf32>
    %77 = arith.addf %73, %76 : vector<32x128xf32>
    %c1_40 = arith.constant 1 : index
    %c0_41 = arith.constant 0 : index
    %c0_42 = arith.constant 0 : index
    %78 = vector.load %arg3[%c1_40, %c0_41, %c0_42] : memref<4x1x128xf32, #tpu.memory_space<vmem>>, vector<1x1x128xf32>
    %79 = vector.shape_cast %78 : vector<1x1x128xf32> to vector<1x128xf32>
    %80 = vector.broadcast %79 : vector<1x128xf32> to vector<32x128xf32>
    %81 = arith.addf %77, %80 : vector<32x128xf32>
    %82 = arith.addf %81, %0 : vector<32x128xf32>
    %c1_i32_43 = arith.constant 1 : i32
    %83 = tpu.dynamic_rotate %82 by %c1_i32_43 dim 0 : vector<32x128xf32>, i32 -> vector<32x128xf32>
    %cst_44 = arith.constant 0.000000e+00 : f32
    %84 = vector.broadcast %cst_44 : f32 to vector<32x128xf32>
    %85 = arith.select %19, %83, %84 : vector<32x128xi1>, vector<32x128xf32>
    %c31_i32_45 = arith.constant 31 : i32
    %86 = tpu.dynamic_rotate %82 by %c31_i32_45 dim 0 : vector<32x128xf32>, i32 -> vector<32x128xf32>
    %cst_46 = arith.constant 0.000000e+00 : f32
    %87 = vector.broadcast %cst_46 : f32 to vector<32x128xf32>
    %88 = arith.select %37, %86, %87 : vector<32x128xi1>, vector<32x128xf32>
    %c6 = arith.constant 6 : index
    %c0_47 = arith.constant 0 : index
    %c0_48 = arith.constant 0 : index
    %89 = vector.load %arg2[%c6, %c0_47, %c0_48] : memref<12x128x128xf32, #tpu.memory_space<vmem>>, vector<1x128x128xf32>
    %90 = vector.shape_cast %89 : vector<1x128x128xf32> to vector<128x128xf32>
    %cst_49 = arith.constant dense<0.000000e+00> : vector<32x128xf32>
    %91 = tpu.matmul %85, %90, %cst_49 {dimension_numbers = #tpu.dot_dimension_numbers<[1], [0], [0], [1], [0, 0, 1, 1], [], []>} : vector<32x128xf32>, vector<128x128xf32>, vector<32x128xf32> -> vector<32x128xf32>
    %c7 = arith.constant 7 : index
    %c0_50 = arith.constant 0 : index
    %c0_51 = arith.constant 0 : index
    %92 = vector.load %arg2[%c7, %c0_50, %c0_51] : memref<12x128x128xf32, #tpu.memory_space<vmem>>, vector<1x128x128xf32>
    %93 = vector.shape_cast %92 : vector<1x128x128xf32> to vector<128x128xf32>
    %cst_52 = arith.constant dense<0.000000e+00> : vector<32x128xf32>
    %94 = tpu.matmul %82, %93, %cst_52 {dimension_numbers = #tpu.dot_dimension_numbers<[1], [0], [0], [1], [0, 0, 1, 1], [], []>} : vector<32x128xf32>, vector<128x128xf32>, vector<32x128xf32> -> vector<32x128xf32>
    %95 = arith.addf %91, %94 : vector<32x128xf32>
    %c8 = arith.constant 8 : index
    %c0_53 = arith.constant 0 : index
    %c0_54 = arith.constant 0 : index
    %96 = vector.load %arg2[%c8, %c0_53, %c0_54] : memref<12x128x128xf32, #tpu.memory_space<vmem>>, vector<1x128x128xf32>
    %97 = vector.shape_cast %96 : vector<1x128x128xf32> to vector<128x128xf32>
    %cst_55 = arith.constant dense<0.000000e+00> : vector<32x128xf32>
    %98 = tpu.matmul %88, %97, %cst_55 {dimension_numbers = #tpu.dot_dimension_numbers<[1], [0], [0], [1], [0, 0, 1, 1], [], []>} : vector<32x128xf32>, vector<128x128xf32>, vector<32x128xf32> -> vector<32x128xf32>
    %99 = arith.addf %95, %98 : vector<32x128xf32>
    %c2_56 = arith.constant 2 : index
    %c0_57 = arith.constant 0 : index
    %c0_58 = arith.constant 0 : index
    %100 = vector.load %arg3[%c2_56, %c0_57, %c0_58] : memref<4x1x128xf32, #tpu.memory_space<vmem>>, vector<1x1x128xf32>
    %101 = vector.shape_cast %100 : vector<1x1x128xf32> to vector<1x128xf32>
    %102 = vector.broadcast %101 : vector<1x128xf32> to vector<32x128xf32>
    %103 = arith.addf %99, %102 : vector<32x128xf32>
    %cst_59 = arith.constant 0.000000e+00 : f32
    %104 = vector.broadcast %cst_59 : f32 to vector<32x128xf32>
    %105 = arith.maximumf %103, %104 : vector<32x128xf32>
    %c1_i32_60 = arith.constant 1 : i32
    %106 = tpu.dynamic_rotate %105 by %c1_i32_60 dim 0 : vector<32x128xf32>, i32 -> vector<32x128xf32>
    %cst_61 = arith.constant 0.000000e+00 : f32
    %107 = vector.broadcast %cst_61 : f32 to vector<32x128xf32>
    %108 = arith.select %19, %106, %107 : vector<32x128xi1>, vector<32x128xf32>
    %c31_i32_62 = arith.constant 31 : i32
    %109 = tpu.dynamic_rotate %105 by %c31_i32_62 dim 0 : vector<32x128xf32>, i32 -> vector<32x128xf32>
    %cst_63 = arith.constant 0.000000e+00 : f32
    %110 = vector.broadcast %cst_63 : f32 to vector<32x128xf32>
    %111 = arith.select %37, %109, %110 : vector<32x128xi1>, vector<32x128xf32>
    %c9 = arith.constant 9 : index
    %c0_64 = arith.constant 0 : index
    %c0_65 = arith.constant 0 : index
    %112 = vector.load %arg2[%c9, %c0_64, %c0_65] : memref<12x128x128xf32, #tpu.memory_space<vmem>>, vector<1x128x128xf32>
    %113 = vector.shape_cast %112 : vector<1x128x128xf32> to vector<128x128xf32>
    %cst_66 = arith.constant dense<0.000000e+00> : vector<32x128xf32>
    %114 = tpu.matmul %108, %113, %cst_66 {dimension_numbers = #tpu.dot_dimension_numbers<[1], [0], [0], [1], [0, 0, 1, 1], [], []>} : vector<32x128xf32>, vector<128x128xf32>, vector<32x128xf32> -> vector<32x128xf32>
    %c10 = arith.constant 10 : index
    %c0_67 = arith.constant 0 : index
    %c0_68 = arith.constant 0 : index
    %115 = vector.load %arg2[%c10, %c0_67, %c0_68] : memref<12x128x128xf32, #tpu.memory_space<vmem>>, vector<1x128x128xf32>
    %116 = vector.shape_cast %115 : vector<1x128x128xf32> to vector<128x128xf32>
    %cst_69 = arith.constant dense<0.000000e+00> : vector<32x128xf32>
    %117 = tpu.matmul %105, %116, %cst_69 {dimension_numbers = #tpu.dot_dimension_numbers<[1], [0], [0], [1], [0, 0, 1, 1], [], []>} : vector<32x128xf32>, vector<128x128xf32>, vector<32x128xf32> -> vector<32x128xf32>
    %118 = arith.addf %114, %117 : vector<32x128xf32>
    %c11 = arith.constant 11 : index
    %c0_70 = arith.constant 0 : index
    %c0_71 = arith.constant 0 : index
    %119 = vector.load %arg2[%c11, %c0_70, %c0_71] : memref<12x128x128xf32, #tpu.memory_space<vmem>>, vector<1x128x128xf32>
    %120 = vector.shape_cast %119 : vector<1x128x128xf32> to vector<128x128xf32>
    %cst_72 = arith.constant dense<0.000000e+00> : vector<32x128xf32>
    %121 = tpu.matmul %111, %120, %cst_72 {dimension_numbers = #tpu.dot_dimension_numbers<[1], [0], [0], [1], [0, 0, 1, 1], [], []>} : vector<32x128xf32>, vector<128x128xf32>, vector<32x128xf32> -> vector<32x128xf32>
    %122 = arith.addf %118, %121 : vector<32x128xf32>
    %c3_73 = arith.constant 3 : index
    %c0_74 = arith.constant 0 : index
    %c0_75 = arith.constant 0 : index
    %123 = vector.load %arg3[%c3_73, %c0_74, %c0_75] : memref<4x1x128xf32, #tpu.memory_space<vmem>>, vector<1x1x128xf32>
    %124 = vector.shape_cast %123 : vector<1x1x128xf32> to vector<1x128xf32>
    %125 = vector.broadcast %124 : vector<1x128xf32> to vector<32x128xf32>
    %126 = arith.addf %122, %125 : vector<32x128xf32>
    %127 = arith.addf %126, %82 : vector<32x128xf32>
    %c0_76 = arith.constant 0 : index
    %c0_77 = arith.constant 0 : index
    %128 = vector.load %arg4[%c0_76, %c0_77] : memref<32x128xf32, #tpu.memory_space<vmem>>, vector<32x128xf32>
    tpu.vector_store %arg4[%c0_76, %c0_77], %127 {strides = array<i32>} : memref<32x128xf32, #tpu.memory_space<vmem>>, vector<32x128xf32>,
    return
  }
  func.func @transform_0(%arg0: i32) -> (i32, i32) {
    %c0_i32 = arith.constant 0 : i32
    %c0_i32_0 = arith.constant 0 : i32
    %c0_i32_1 = arith.constant 0 : i32
    return %c0_i32, %c0_i32_0 : i32, i32
  }
  func.func @transform_1(%arg0: i32) -> (i32, i32, i32) {
    %c0_i32 = arith.constant 0 : i32
    %c0_i32_0 = arith.constant 0 : i32
    %c0_i32_1 = arith.constant 0 : i32
    %c0_i32_2 = arith.constant 0 : i32
    return %c0_i32, %c0_i32_0, %c0_i32_1 : i32, i32, i32
  }
  func.func @transform_2(%arg0: i32) -> (i32, i32, i32) {
    %c0_i32 = arith.constant 0 : i32
    %c0_i32_0 = arith.constant 0 : i32
    %c0_i32_1 = arith.constant 0 : i32
    %c0_i32_2 = arith.constant 0 : i32
    return %c0_i32, %c0_i32_0, %c0_i32_1 : i32, i32, i32
  }
  func.func @transform_3(%arg0: i32) -> (i32, i32) {
    %c0_i32 = arith.constant 0 : i32
    %c0_i32_0 = arith.constant 0 : i32
    %c0_i32_1 = arith.constant 0 : i32
    return %c0_i32, %c0_i32_0 : i32, i32
  }
}

</mosaic_0001>

<llo_original>
// kernel: tpu_custom_call.1
$region0: #{tpu_custom_call.1}
  #allocation0 [shape = 'u32[]', space=smem, size = 0x4, offset = 0x4, fixed_abs, tag = 'smem constant byte address 0x4 - core index']
  #allocation1 [shape = 'u32[144,128]{1,0:T(1,128)}', space=vmem, size = 0x12000, scoped, tag = 'internal scratch']
  %s0 = inlined_call_operand.hbm [shape: f32[32,128], index: 0, kind: input, shape index: {}]
  %s1 = inlined_call_operand.hbm [shape: f32[12,128,128], index: 1, kind: input, shape index: {}]
  %s2 = inlined_call_operand.vmem [shape: f32[4,1,128], index: 2, kind: input, shape index: {}]
  %s3 = inlined_call_operand.hbm [shape: f32[32,128], index: 3, kind: output, shape index: {}]
  %s4 = sld [smem:[#allocation0]]
  $region30: #{tpu_custom_call.1} parent=0
    _
  %s6 = ssub.s32 1, %s4
  %s7 = scalar_select 0, %s6, %s4
  $region1: #{tpu_custom_call.1} parent=0
    #allocation2 [shape = 'u8[16384]{0}', space=vmem, size = 0x4000, scoped, tag = 'input window, operand 0, single buffered']
    #allocation3 [shape = 's32[1]{0}', space=sflag, size = 0x4, scoped, tag = 'scoped memory for tpu_custom_call.1']
    #allocation4 [shape = 's32[1]{0}', space=sflag, size = 0x4, scoped, tag = 'scoped memory for tpu_custom_call.1']
    #allocation5 [shape = 'u8[786432]{0}', space=vmem, size = 0xc0000, scoped, tag = 'input window, operand 1, single buffered']
    #allocation6 [shape = 's32[1]{0}', space=sflag, size = 0x4, scoped, tag = 'scoped memory for tpu_custom_call.1']
    #allocation7 [shape = 'u8[16384]{0}', space=vmem, size = 0x4000, scoped, tag = 'output window, operand 0, single buffered']
    %8 = vsyncpa [#allocation3], 0
    %9 = vsyncpa [#allocation6], 0
    %10 = vsyncpa [#allocation4], 0
    // Predicated region
    $region2: #{tpu_custom_call.1} parent=1 // pred_check
      _
    $region3: #{tpu_custom_call.1} parent=1 // pred_check_branch
      %12 = sbr.rel (0) target = $region5
    $region4: #{tpu_custom_call.1} parent=1 // pred_region
      %s14 = ssub.s32 512, 512
      %15 = vsyncadd [#allocation3], %s14
      %s16 = sshll.u32 [#allocation2], 4
      %s17 = int_to_ptr.vmem [resolvable:$true] %s16
      %22 = dma.hbm_to_vmem [thread:$0]  %s0, 512, %s17, [#allocation3], 128, 128, 8
    $region5: #{tpu_custom_call.1} parent=1 // pred_fallthru
      _
    // Predicated region
    $region6: #{tpu_custom_call.1} parent=1 // pred_check
      _
    $region7: #{tpu_custom_call.1} parent=1 // pred_check_branch
      %24 = sbr.rel (0) target = $region9
    $region8: #{tpu_custom_call.1} parent=1 // pred_region
      %s26 = ssub.s32 24576, 24576
      %27 = vsyncadd [#allocation6], %s26
      %s28 = sshll.u32 [#allocation5], 4
      %s29 = int_to_ptr.vmem [resolvable:$true] %s28
      %34 = dma.hbm_to_vmem [thread:$0]  %s1, 24576, %s29, [#allocation6], 128, 128, 8
    $region9: #{tpu_custom_call.1} parent=1 // pred_fallthru
      _
    // Predicated region
    $region10: #{tpu_custom_call.1} parent=1 // pred_check
      _
    $region11: #{tpu_custom_call.1} parent=1 // pred_check_branch
      %36 = sbr.rel (0) target = $region13
    $region12: #{tpu_custom_call.1} parent=1 // pred_region
      _
    $region13: #{tpu_custom_call.1} parent=1 // pred_fallthru
      _
    // Predicated region
    $region14: #{tpu_custom_call.1} parent=1 // pred_check
      _
    $region15: #{tpu_custom_call.1} parent=1 // pred_check_branch
      %38 = sbr.rel (0) target = $region17
    $region16: #{tpu_custom_call.1} parent=1 // pred_region
      %39 = dma.done [#allocation3], 512
    $region17: #{tpu_custom_call.1} parent=1 // pred_fallthru
      _
    // Predicated region
    $region18: #{tpu_custom_call.1} parent=1 // pred_check
      _
    $region19: #{tpu_custom_call.1} parent=1 // pred_check_branch
      %41 = sbr.rel (0) target = $region21
    $region20: #{tpu_custom_call.1} parent=1 // pred_region
      %42 = dma.done [#allocation6], 24576
    $region21: #{tpu_custom_call.1} parent=1 // pred_fallthru
      _
    %v43 = vld [vmem:[#allocation2] sm:$0xff]
    %v44 = vld [vmem:[#allocation2 + $0x8] sm:$0xff]
    %v45 = vld [vmem:[#allocation2 + $0x10] sm:$0xff]
    %v46 = vld [vmem:[#allocation2 + $0x18] sm:$0xff]
    %v47 = vlaneseq
    %v48 = vshrl.u32 %v47, 7
    %v49 = vadd.s32 %v48, 8
    %v50 = vadd.s32 %v48, 16
    %v51 = vadd.s32 %v48, 24
    %vm52 = vcmp.lt.s32.totalorder %v48, 0
    %v53 = vsub.s32 0, %v48
    %v54 = vsel %vm52, %v53, %v48
    %v55 = vshrl.u32 %v54, 4
    %v56 = vand.u32 %v54, 15
    %v57 = vsub.s32 0, %v56
    %v58 = vsel %vm52, %v57, %v56
    %vm59 = vcmp.lt.s32.totalorder %v49, 0
    %v60 = vsub.s32 0, %v49
    %v61 = vsel %vm59, %v60, %v49
    %v62 = vshrl.u32 %v61, 4
    %v63 = vand.u32 %v61, 15
    %v64 = vsub.s32 0, %v63
    %v65 = vsel %vm59, %v64, %v63
    %vm66 = vcmp.lt.s32.totalorder %v50, 0
    %v67 = vsub.s32 0, %v50
    %v68 = vsel %vm66, %v67, %v50
    %v69 = vshrl.u32 %v68, 4
    %v70 = vand.u32 %v68, 15
    %v71 = vsub.s32 0, %v70
    %v72 = vsel %vm66, %v71, %v70
    %vm73 = vcmp.lt.s32.totalorder %v51, 0
    %v74 = vsub.s32 0, %v51
    %v75 = vsel %vm73, %v74, %v51
    %v76 = vshrl.u32 %v75, 4
    %v77 = vand.u32 %v75, 15
    %v78 = vsub.s32 0, %v77
    %v79 = vsel %vm73, %v78, %v77
    %vm80 = vcmp.ne.s32.totalorder %v58, 0
    %vm81 = vcmp.ne.s32.totalorder %v65, 0
    %vm82 = vcmp.ne.s32.totalorder %v72, 0
    %vm83 = vcmp.ne.s32.totalorder %v79, 0
    %vm84 = vcmp.lt.s32.totalorder %v58, 0
    %vm85 = vcmp.lt.s32.totalorder %v65, 0
    %vm86 = vcmp.lt.s32.totalorder %v72, 0
    %vm87 = vcmp.lt.s32.totalorder %v79, 0
    %vm88 = vmand %vm84, %vm80
    %vm89 = vmand %vm85, %vm81
    %vm90 = vmand %vm86, %vm82
    %vm91 = vmand %vm87, %vm83
    %v92 = vadd.s32 %v58, 16
    %v93 = vadd.s32 %v65, 16
    %v94 = vadd.s32 %v72, 16
    %v95 = vadd.s32 %v79, 16
    %v96 = vsel %vm88, %v92, %v58
    %v97 = vsel %vm89, %v93, %v65
    %v98 = vsel %vm90, %v94, %v72
    %v99 = vsel %vm91, %v95, %v79
    %vm100 = vcmp.ne.s32.totalorder %v96, 0
    %vm101 = vcmp.ne.s32.totalorder %v97, 0
    %vm102 = vcmp.ne.s32.totalorder %v98, 0
    %vm103 = vcmp.ne.s32.totalorder %v99, 0
    %vm104 = vcmp.ne.s32.totalorder %v96, 15
    %vm105 = vcmp.ne.s32.totalorder %v97, 15
    %vm106 = vcmp.ne.s32.totalorder %v98, 15
    %vm107 = vcmp.ne.s32.totalorder %v99, 15
    %v108 = vrot.slane %v43, 7
    %v109 = vrot.slane %v44, 7
    %v110 = vrot.slane %v45, 7
    %v111 = vrot.slane %v46, 7
    %vm112 = vcmp.lt.s32.totalorder %v48, 1
    %v113 = vsel %vm112, %v110, %v111
    %v114 = vsel %vm112, %v109, %v110
    %v115 = vsel %vm112, %v108, %v109
    %v116 = vsel %vm112, %v111, %v108
    %v117 = vsel %vm100, %v116, 0.0
    %v118 = vsel %vm101, %v115, 0.0
    %v119 = vsel %vm102, %v114, 0.0
    %v120 = vsel %vm103, %v113, 0.0
    %v121 = vrot.slane %v43, 1
    %v122 = vrot.slane %v44, 1
    %v123 = vrot.slane %v45, 1
    %v124 = vrot.slane %v46, 1
    %vm125 = vcmp.lt.s32.totalorder %v48, 7
    %v126 = vsel %vm125, %v123, %v124
    %v127 = vsel %vm125, %v122, %v123
    %v128 = vsel %vm125, %v121, %v122
    %v129 = vsel %vm125, %v124, %v121
    %v130 = vsel %vm104, %v128, 0.0
    %v131 = vsel %vm105, %v127, 0.0
    %v132 = vsel %vm106, %v126, 0.0
    %v133 = vsel %vm107, %v129, 0.0
    %v134 = vld [vmem:[#allocation5] sm:$0xff]
    %v135 = vld [vmem:[#allocation5 + $0x8] sm:$0xff]
    %v136 = vld [vmem:[#allocation5 + $0x10] sm:$0xff]
    %v137 = vld [vmem:[#allocation5 + $0x18] sm:$0xff]
    %v138 = vld [vmem:[#allocation5 + $0x20] sm:$0xff]
    %v139 = vld [vmem:[#allocation5 + $0x28] sm:$0xff]
    %v140 = vld [vmem:[#allocation5 + $0x30] sm:$0xff]
    %v141 = vld [vmem:[#allocation5 + $0x38] sm:$0xff]
    %v142 = vld [vmem:[#allocation5 + $0x40] sm:$0xff]
    %v143 = vld [vmem:[#allocation5 + $0x48] sm:$0xff]
    %v144 = vld [vmem:[#allocation5 + $0x50] sm:$0xff]
    %v145 = vld [vmem:[#allocation5 + $0x58] sm:$0xff]
    %v146 = vld [vmem:[#allocation5 + $0x60] sm:$0xff]
    %v147 = vld [vmem:[#allocation5 + $0x68] sm:$0xff]
    %v148 = vld [vmem:[#allocation5 + $0x70] sm:$0xff]
    %v149 = vld [vmem:[#allocation5 + $0x78] sm:$0xff]
    %s150 = scalar_lea.vmem [#allocation5], 128
    %v151 = vld [vmem:[%s150] sm:$0xff]
    %v152 = vld [vmem:[%s150 + $0x8] sm:$0xff]
    %v153 = vld [vmem:[%s150 + $0x10] sm:$0xff]
    %v154 = vld [vmem:[%s150 + $0x18] sm:$0xff]
    %v155 = vld [vmem:[%s150 + $0x20] sm:$0xff]
    %v156 = vld [vmem:[%s150 + $0x28] sm:$0xff]
    %v157 = vld [vmem:[%s150 + $0x30] sm:$0xff]
    %v158 = vld [vmem:[%s150 + $0x38] sm:$0xff]
    %v159 = vld [vmem:[%s150 + $0x40] sm:$0xff]
    %v160 = vld [vmem:[%s150 + $0x48] sm:$0xff]
    %v161 = vld [vmem:[%s150 + $0x50] sm:$0xff]
    %v162 = vld [vmem:[%s150 + $0x58] sm:$0xff]
    %v163 = vld [vmem:[%s150 + $0x60] sm:$0xff]
    %v164 = vld [vmem:[%s150 + $0x68] sm:$0xff]
    %v165 = vld [vmem:[%s150 + $0x70] sm:$0xff]
    %v166 = vld [vmem:[%s150 + $0x78] sm:$0xff]
    %167 = vmatprep.subr.mxu0 0.0
    %168 = vmatpush1.msra.mxu0 %v151
    %169 = vmatprep.subr.mxu0 0.0
    %170 = vmatpush1.msra.mxu0 %v152
    %171 = vmatprep.subr.mxu0 0.0
    %172 = vmatpush1.msra.mxu0 %v153
    %173 = vmatprep.subr.mxu0 0.0
    %174 = vmatpush1.msra.mxu0 %v154
    %175 = vmatprep.subr.mxu0 0.0
    %176 = vmatpush1.msra.mxu0 %v155
    %177 = vmatprep.subr.mxu0 0.0
    %178 = vmatpush1.msra.mxu0 %v156
    %179 = vmatprep.subr.mxu0 0.0
    %180 = vmatpush1.msra.mxu0 %v157
    %181 = vmatprep.subr.mxu0 0.0
    %182 = vmatpush1.msra.mxu0 %v158
    %183 = vmatprep.subr.mxu0 0.0
    %184 = vmatpush1.msra.mxu0 %v159
    %185 = vmatprep.subr.mxu0 0.0
    %186 = vmatpush1.msra.mxu0 %v160
    %187 = vmatprep.subr.mxu0 0.0
    %188 = vmatpush1.msra.mxu0 %v161
    %189 = vmatprep.subr.mxu0 0.0
    %190 = vmatpush1.msra.mxu0 %v162
    %191 = vmatprep.subr.mxu0 0.0
    %192 = vmatpush1.msra.mxu0 %v163
    %193 = vmatprep.subr.mxu0 0.0
    %194 = vmatpush1.msra.mxu0 %v164
    %195 = vmatprep.subr.mxu0 0.0
    %196 = vmatpush1.msra.mxu0 %v165
    %197 = vmatprep.subr.mxu0 0.0
    %198 = vmatpush1.msra.mxu0 %v166
    %199 = vmatprep.subr.mxu0 0.0
    %200 = vmatpush1.msra.mxu0 0.0
    %201 = vmatprep.subr.mxu0 0.0
    %202 = vmatpush1.msra.mxu0 0.0
    %203 = vmatprep.subr.mxu0 0.0
    %204 = vmatpush1.msra.mxu0 0.0
    %205 = vmatprep.subr.mxu0 0.0
    %206 = vmatpush1.msra.mxu0 0.0
    %207 = vmatprep.subr.mxu0 0.0
    %208 = vmatpush1.msra.mxu0 0.0
    %209 = vmatprep.subr.mxu0 0.0
    %210 = vmatpush1.msra.mxu0 0.0
    %211 = vmatprep.subr.mxu0 0.0
    %212 = vmatpush1.msra.mxu0 0.0
    %213 = vmatprep.subr.mxu0 0.0
    %214 = vmatpush1.msra.mxu0 0.0
    %215 = vmatprep.subr.mxu0 0.0
    %216 = vmatpush1.msra.mxu0 0.0
    %217 = vmatprep.subr.mxu0 0.0
    %218 = vmatpush1.msra.mxu0 0.0
    %219 = vmatprep.subr.mxu0 0.0
    %220 = vmatpush1.msra.mxu0 0.0
    %221 = vmatprep.subr.mxu0 0.0
    %222 = vmatpush1.msra.mxu0 0.0
    %223 = vmatprep.subr.mxu0 0.0
    %224 = vmatpush1.msra.mxu0 0.0
    %225 = vmatprep.subr.mxu0 0.0
    %226 = vmatpush1.msra.mxu0 0.0
    %227 = vmatprep.subr.mxu0 0.0
    %228 = vmatpush1.msra.mxu0 0.0
    %229 = vmatprep.subr.mxu0 0.0
    %230 = vmatpush1.msra.mxu0 0.0
    %231 = vmatprep.mubr.f32.mxu0 0.0
    %232 = vmatmul.mubr.f32.gmra.mrb[0].mxu0 %v43
    %v233 = vpop.f32.mrb[0].mxu0
    %v234 = vadd.f32 0.0, %v233
    %v235 = vpop.f32.mrb[0].mxu0
    %236 = vmatprep.mubr.f32.mxu0 0.0
    %237 = vmatmul.mubr.f32.gmra.mrb[0].mxu0 %v44
    %v238 = vpop.f32.mrb[0].mxu0
    %v239 = vadd.f32 0.0, %v238
    %v240 = vpop.f32.mrb[0].mxu0
    %241 = vmatprep.mubr.f32.mxu0 0.0
    %242 = vmatmul.mubr.f32.gmra.mrb[0].mxu0 %v45
    %v243 = vpop.f32.mrb[0].mxu0
    %v244 = vadd.f32 0.0, %v243
    %v245 = vpop.f32.mrb[0].mxu0
    %246 = vmatprep.mubr.f32.mxu0 0.0
    %247 = vmatmul.mubr.f32.gmra.mrb[0].mxu0 %v46
    %v248 = vpop.f32.mrb[0].mxu0
    %v249 = vadd.f32 0.0, %v248
    %v250 = vpop.f32.mrb[0].mxu0
    %251 = vdwg.mxu0
    %252 = vmatprep.subr.mxu0 0.0
    %253 = vmatpush1.msra.mxu0 %v134
    %254 = vmatprep.subr.mxu0 0.0
    %255 = vmatpush1.msra.mxu0 %v135
    %256 = vmatprep.subr.mxu0 0.0
    %257 = vmatpush1.msra.mxu0 %v136
    %258 = vmatprep.subr.mxu0 0.0
    %259 = vmatpush1.msra.mxu0 %v137
    %260 = vmatprep.subr.mxu0 0.0
    %261 = vmatpush1.msra.mxu0 %v138
    %262 = vmatprep.subr.mxu0 0.0
    %263 = vmatpush1.msra.mxu0 %v139
    %264 = vmatprep.subr.mxu0 0.0
    %265 = vmatpush1.msra.mxu0 %v140
    %266 = vmatprep.subr.mxu0 0.0
    %267 = vmatpush1.msra.mxu0 %v141
    %268 = vmatprep.subr.mxu0 0.0
    %269 = vmatpush1.msra.mxu0 %v142
    %270 = vmatprep.subr.mxu0 0.0
    %271 = vmatpush1.msra.mxu0 %v143
    %272 = vmatprep.subr.mxu0 0.0
    %273 = vmatpush1.msra.mxu0 %v144
    %274 = vmatprep.subr.mxu0 0.0
    %275 = vmatpush1.msra.mxu0 %v145
    %276 = vmatprep.subr.mxu0 0.0
    %277 = vmatpush1.msra.mxu0 %v146
    %278 = vmatprep.subr.mxu0 0.0
    %279 = vmatpush1.msra.mxu0 %v147
    %280 = vmatprep.subr.mxu0 0.0
    %281 = vmatpush1.msra.mxu0 %v148
    %282 = vmatprep.subr.mxu0 0.0
    %283 = vmatpush1.msra.mxu0 %v149
    %284 = vmatprep.subr.mxu0 0.0
    %285 = vmatpush1.msra.mxu0 0.0
    %286 = vmatprep.subr.mxu0 0.0
    %287 = vmatpush1.msra.mxu0 0.0
    %288 = vmatprep.subr.mxu0 0.0
    %289 = vmatpush1.msra.mxu0 0.0
    %290 = vmatprep.subr.mxu0 0.0
    %291 = vmatpush1.msra.mxu0 0.0
    %292 = vmatprep.subr.mxu0 0.0
    %293 = vmatpush1.msra.mxu0 0.0
    %294 = vmatprep.subr.mxu0 0.0
    %295 = vmatpush1.msra.mxu0 0.0
    %296 = vmatprep.subr.mxu0 0.0
    %297 = vmatpush1.msra.mxu0 0.0
    %298 = vmatprep.subr.mxu0 0.0
    %299 = vmatpush1.msra.mxu0 0.0
    %300 = vmatprep.subr.mxu0 0.0
    %301 = vmatpush1.msra.mxu0 0.0
    %302 = vmatprep.subr.mxu0 0.0
    %303 = vmatpush1.msra.mxu0 0.0
    %304 = vmatprep.subr.mxu0 0.0
    %305 = vmatpush1.msra.mxu0 0.0
    %306 = vmatprep.subr.mxu0 0.0
    %307 = vmatpush1.msra.mxu0 0.0
    %308 = vmatprep.subr.mxu0 0.0
    %309 = vmatpush1.msra.mxu0 0.0
    %310 = vmatprep.subr.mxu0 0.0
    %311 = vmatpush1.msra.mxu0 0.0
    %312 = vmatprep.subr.mxu0 0.0
    %313 = vmatpush1.msra.mxu0 0.0
    %314 = vmatprep.subr.mxu0 0.0
    %315 = vmatpush1.msra.mxu0 0.0
    %316 = vmatprep.mubr.f32.mxu0 0.0
    %317 = vmatmul.mubr.f32.gmra.mrb[0].mxu0 %v117
    %v318 = vpop.f32.mrb[0].mxu0
    %v319 = vadd.f32 %v234, %v318
    %v320 = vpop.f32.mrb[0].mxu0
    %321 = vmatprep.mubr.f32.mxu0 0.0
    %322 = vmatmul.mubr.f32.gmra.mrb[0].mxu0 %v118
    %v323 = vpop.f32.mrb[0].mxu0
    %v324 = vadd.f32 %v239, %v323
    %v325 = vpop.f32.mrb[0].mxu0
    %326 = vmatprep.mubr.f32.mxu0 0.0
    %327 = vmatmul.mubr.f32.gmra.mrb[0].mxu0 %v119
    %v328 = vpop.f32.mrb[0].mxu0
    %v329 = vadd.f32 %v244, %v328
    %v330 = vpop.f32.mrb[0].mxu0
    %331 = vmatprep.mubr.f32.mxu0 0.0
    %332 = vmatmul.mubr.f32.gmra.mrb[0].mxu0 %v120
    %v333 = vpop.f32.mrb[0].mxu0
    %v334 = vadd.f32 %v249, %v333
    %v335 = vpop.f32.mrb[0].mxu0
    %336 = vdwg.mxu0
    %s337 = scalar_lea.vmem [#allocation5], 256
    %v338 = vld [vmem:[%s337] sm:$0xff]
    %v339 = vld [vmem:[%s337 + $0x8] sm:$0xff]
    %v340 = vld [vmem:[%s337 + $0x10] sm:$0xff]
    %v341 = vld [vmem:[%s337 + $0x18] sm:$0xff]
    %v342 = vld [vmem:[%s337 + $0x20] sm:$0xff]
    %v343 = vld [vmem:[%s337 + $0x28] sm:$0xff]
    %v344 = vld [vmem:[%s337 + $0x30] sm:$0xff]
    %v345 = vld [vmem:[%s337 + $0x38] sm:$0xff]
    %v346 = vld [vmem:[%s337 + $0x40] sm:$0xff]
    %v347 = vld [vmem:[%s337 + $0x48] sm:$0xff]
    %v348 = vld [vmem:[%s337 + $0x50] sm:$0xff]
    %v349 = vld [vmem:[%s337 + $0x58] sm:$0xff]
    %v350 = vld [vmem:[%s337 + $0x60] sm:$0xff]
    %v351 = vld [vmem:[%s337 + $0x68] sm:$0xff]
    %v352 = vld [vmem:[%s337 + $0x70] sm:$0xff]
    %v353 = vld [vmem:[%s337 + $0x78] sm:$0xff]
    %354 = vmatprep.subr.mxu0 0.0
    %355 = vmatpush1.msra.mxu0 %v338
    %356 = vmatprep.subr.mxu0 0.0
    %357 = vmatpush1.msra.mxu0 %v339
    %358 = vmatprep.subr.mxu0 0.0
    %359 = vmatpush1.msra.mxu0 %v340
    %360 = vmatprep.subr.mxu0 0.0
    %361 = vmatpush1.msra.mxu0 %v341
    %362 = vmatprep.subr.mxu0 0.0
    %363 = vmatpush1.msra.mxu0 %v342
    %364 = vmatprep.subr.mxu0 0.0
    %365 = vmatpush1.msra.mxu0 %v343
    %366 = vmatprep.subr.mxu0 0.0
    %367 = vmatpush1.msra.mxu0 %v344
    %368 = vmatprep.subr.mxu0 0.0
    %369 = vmatpush1.msra.mxu0 %v345
    %370 = vmatprep.subr.mxu0 0.0
    %371 = vmatpush1.msra.mxu0 %v346
    %372 = vmatprep.subr.mxu0 0.0
    %373 = vmatpush1.msra.mxu0 %v347
    %374 = vmatprep.subr.mxu0 0.0
    %375 = vmatpush1.msra.mxu0 %v348
    %376 = vmatprep.subr.mxu0 0.0
    %377 = vmatpush1.msra.mxu0 %v349
    %378 = vmatprep.subr.mxu0 0.0
    %379 = vmatpush1.msra.mxu0 %v350
    %380 = vmatprep.subr.mxu0 0.0
    %381 = vmatpush1.msra.mxu0 %v351
    %382 = vmatprep.subr.mxu0 0.0
    %383 = vmatpush1.msra.mxu0 %v352
    %384 = vmatprep.subr.mxu0 0.0
    %385 = vmatpush1.msra.mxu0 %v353
    %386 = vmatprep.subr.mxu0 0.0
    %387 = vmatpush1.msra.mxu0 0.0
    %388 = vmatprep.subr.mxu0 0.0
    %389 = vmatpush1.msra.mxu0 0.0
    %390 = vmatprep.subr.mxu0 0.0
    %391 = vmatpush1.msra.mxu0 0.0
    %392 = vmatprep.subr.mxu0 0.0
    %393 = vmatpush1.msra.mxu0 0.0
    %394 = vmatprep.subr.mxu0 0.0
    %395 = vmatpush1.msra.mxu0 0.0
    %396 = vmatprep.subr.mxu0 0.0
    %397 = vmatpush1.msra.mxu0 0.0
    %398 = vmatprep.subr.mxu0 0.0
    %399 = vmatpush1.msra.mxu0 0.0
    %400 = vmatprep.subr.mxu0 0.0
    %401 = vmatpush1.msra.mxu0 0.0
    %402 = vmatprep.subr.mxu0 0.0
    %403 = vmatpush1.msra.mxu0 0.0
    %404 = vmatprep.subr.mxu0 0.0
    %405 = vmatpush1.msra.mxu0 0.0
    %406 = vmatprep.subr.mxu0 0.0
    %407 = vmatpush1.msra.mxu0 0.0
    %408 = vmatprep.subr.mxu0 0.0
    %409 = vmatpush1.msra.mxu0 0.0
    %410 = vmatprep.subr.mxu0 0.0
    %411 = vmatpush1.msra.mxu0 0.0
    %412 = vmatprep.subr.mxu0 0.0
    %413 = vmatpush1.msra.mxu0 0.0
    %414 = vmatprep.subr.mxu0 0.0
    %415 = vmatpush1.msra.mxu0 0.0
    %416 = vmatprep.subr.mxu0 0.0
    %417 = vmatpush1.msra.mxu0 0.0
    %418 = vmatprep.mubr.f32.mxu0 0.0
    %419 = vmatmul.mubr.f32.gmra.mrb[0].mxu0 %v130
    %v420 = vpop.f32.mrb[0].mxu0
    %v421 = vadd.f32 0.0, %v420
    %v422 = vpop.f32.mrb[0].mxu0
    %423 = vmatprep.mubr.f32.mxu0 0.0
    %424 = vmatmul.mubr.f32.gmra.mrb[0].mxu0 %v131
    %v425 = vpop.f32.mrb[0].mxu0
    %v426 = vadd.f32 0.0, %v425
    %v427 = vpop.f32.mrb[0].mxu0
    %428 = vmatprep.mubr.f32.mxu0 0.0
    %429 = vmatmul.mubr.f32.gmra.mrb[0].mxu0 %v132
    %v430 = vpop.f32.mrb[0].mxu0
    %v431 = vadd.f32 0.0, %v430
    %v432 = vpop.f32.mrb[0].mxu0
    %433 = vmatprep.mubr.f32.mxu0 0.0
    %434 = vmatmul.mubr.f32.gmra.mrb[0].mxu0 %v133
    %v435 = vpop.f32.mrb[0].mxu0
    %v436 = vadd.f32 0.0, %v435
    %v437 = vpop.f32.mrb[0].mxu0
    %438 = vdwg.mxu0
    %v439 = vadd.f32 %v319, %v421
    %v440 = vadd.f32 %v324, %v426
    %v441 = vadd.f32 %v329, %v431
    %v442 = vadd.f32 %v334, %v436
    %v443 = vld [vmem:[%s2] sm:$0x1]
    %v445 = vlaneseq
    %v446 = vshrl.u32 %v445, 7
    %v447 = vsub.s32 0, %v446
    %v448 = vrot.slane %v443, %v447
    %v450 = vadd.f32 %v439, %v448
    %v451 = vadd.f32 %v440, %v448
    %v452 = vadd.f32 %v441, %v448
    %v453 = vadd.f32 %v442, %v448
    %v454 = vmax.f32 %v450, 0.0
    %v455 = vmax.f32 %v451, 0.0
    %v456 = vmax.f32 %v452, 0.0
    %v457 = vmax.f32 %v453, 0.0
    %v458 = vrot.slane %v454, 7
    %v459 = vrot.slane %v455, 7
    %v460 = vrot.slane %v456, 7
    %v461 = vrot.slane %v457, 7
    %v462 = vsel %vm112, %v460, %v461
    %v463 = vsel %vm112, %v459, %v460
    %v464 = vsel %vm112, %v458, %v459
    %v465 = vsel %vm112, %v461, %v458
    %v466 = vsel %vm100, %v465, 0.0
    %v467 = vsel %vm101, %v464, 0.0
    %v468 = vsel %vm102, %v463, 0.0
    %v469 = vsel %vm103, %v462, 0.0
    %v470 = vrot.slane %v454, 1
    %v471 = vrot.slane %v455, 1
    %v472 = vrot.slane %v456, 1
    %v473 = vrot.slane %v457, 1
    %v474 = vsel %vm125, %v472, %v473
    %v475 = vsel %vm125, %v471, %v472
    %v476 = vsel %vm125, %v470, %v471
    %v477 = vsel %vm125, %v473, %v470
    %v478 = vsel %vm104, %v476, 0.0
    %v479 = vsel %vm105, %v475, 0.0
    %v480 = vsel %vm106, %v474, 0.0
    %v481 = vsel %vm107, %v477, 0.0
    %s482 = scalar_lea.vmem [#allocation5], 384
    %v483 = vld [vmem:[%s482] sm:$0xff]
    %v484 = vld [vmem:[%s482 + $0x8] sm:$0xff]
    %v485 = vld [vmem:[%s482 + $0x10] sm:$0xff]
    %v486 = vld [vmem:[%s482 + $0x18] sm:$0xff]
    %v487 = vld [vmem:[%s482 + $0x20] sm:$0xff]
    %v488 = vld [vmem:[%s482 + $0x28] sm:$0xff]
    %v489 = vld [vmem:[%s482 + $0x30] sm:$0xff]
    %v490 = vld [vmem:[%s482 + $0x38] sm:$0xff]
    %v491 = vld [vmem:[%s482 + $0x40] sm:$0xff]
    %v492 = vld [vmem:[%s482 + $0x48] sm:$0xff]
    %v493 = vld [vmem:[%s482 + $0x50] sm:$0xff]
    %v494 = vld [vmem:[%s482 + $0x58] sm:$0xff]
    %v495 = vld [vmem:[%s482 + $0x60] sm:$0xff]
    %v496 = vld [vmem:[%s482 + $0x68] sm:$0xff]
    %v497 = vld [vmem:[%s482 + $0x70] sm:$0xff]
    %v498 = vld [vmem:[%s482 + $0x78] sm:$0xff]
    %s499 = scalar_lea.vmem [#allocation5], 512
    %v500 = vld [vmem:[%s499] sm:$0xff]
    %v501 = vld [vmem:[%s499 + $0x8] sm:$0xff]
    %v502 = vld [vmem:[%s499 + $0x10] sm:$0xff]
    %v503 = vld [vmem:[%s499 + $0x18] sm:$0xff]
    %v504 = vld [vmem:[%s499 + $0x20] sm:$0xff]
    %v505 = vld [vmem:[%s499 + $0x28] sm:$0xff]
    %v506 = vld [vmem:[%s499 + $0x30] sm:$0xff]
    %v507 = vld [vmem:[%s499 + $0x38] sm:$0xff]
    %v508 = vld [vmem:[%s499 + $0x40] sm:$0xff]
    %v509 = vld [vmem:[%s499 + $0x48] sm:$0xff]
    %v510 = vld [vmem:[%s499 + $0x50] sm:$0xff]
    %v511 = vld [vmem:[%s499 + $0x58] sm:$0xff]
    %v512 = vld [vmem:[%s499 + $0x60] sm:$0xff]
    %v513 = vld [vmem:[%s499 + $0x68] sm:$0xff]
    %v514 = vld [vmem:[%s499 + $0x70] sm:$0xff]
    %v515 = vld [vmem:[%s499 + $0x78] sm:$0xff]
    %516 = vmatprep.subr.mxu0 0.0
    %517 = vmatpush1.msra.mxu0 %v500
    %518 = vmatprep.subr.mxu0 0.0
    %519 = vmatpush1.msra.mxu0 %v501
    %520 = vmatprep.subr.mxu0 0.0
    %521 = vmatpush1.msra.mxu0 %v502
    %522 = vmatprep.subr.mxu0 0.0
    %523 = vmatpush1.msra.mxu0 %v503
    %524 = vmatprep.subr.mxu0 0.0
    %525 = vmatpush1.msra.mxu0 %v504
    %526 = vmatprep.subr.mxu0 0.0
    %527 = vmatpush1.msra.mxu0 %v505
    %528 = vmatprep.subr.mxu0 0.0
    %529 = vmatpush1.msra.mxu0 %v506
    %530 = vmatprep.subr.mxu0 0.0
    %531 = vmatpush1.msra.mxu0 %v507
    %532 = vmatprep.subr.mxu0 0.0
    %533 = vmatpush1.msra.mxu0 %v508
    %534 = vmatprep.subr.mxu0 0.0
    %535 = vmatpush1.msra.mxu0 %v509
    %536 = vmatprep.subr.mxu0 0.0
    %537 = vmatpush1.msra.mxu0 %v510
    %538 = vmatprep.subr.mxu0 0.0
    %539 = vmatpush1.msra.mxu0 %v511
    %540 = vmatprep.subr.mxu0 0.0
    %541 = vmatpush1.msra.mxu0 %v512
    %542 = vmatprep.subr.mxu0 0.0
    %543 = vmatpush1.msra.mxu0 %v513
    %544 = vmatprep.subr.mxu0 0.0
    %545 = vmatpush1.msra.mxu0 %v514
    %546 = vmatprep.subr.mxu0 0.0
    %547 = vmatpush1.msra.mxu0 %v515
    %548 = vmatprep.subr.mxu0 0.0
    %549 = vmatpush1.msra.mxu0 0.0
    %550 = vmatprep.subr.mxu0 0.0
    %551 = vmatpush1.msra.mxu0 0.0
    %552 = vmatprep.subr.mxu0 0.0
    %553 = vmatpush1.msra.mxu0 0.0
    %554 = vmatprep.subr.mxu0 0.0
    %555 = vmatpush1.msra.mxu0 0.0
    %556 = vmatprep.subr.mxu0 0.0
    %557 = vmatpush1.msra.mxu0 0.0
    %558 = vmatprep.subr.mxu0 0.0
    %559 = vmatpush1.msra.mxu0 0.0
    %560 = vmatprep.subr.mxu0 0.0
    %561 = vmatpush1.msra.mxu0 0.0
    %562 = vmatprep.subr.mxu0 0.0
    %563 = vmatpush1.msra.mxu0 0.0
    %564 = vmatprep.subr.mxu0 0.0
    %565 = vmatpush1.msra.mxu0 0.0
    %566 = vmatprep.subr.mxu0 0.0
    %567 = vmatpush1.msra.mxu0 0.0
    %568 = vmatprep.subr.mxu0 0.0
    %569 = vmatpush1.msra.mxu0 0.0
    %570 = vmatprep.subr.mxu0 0.0
    %571 = vmatpush1.msra.mxu0 0.0
    %572 = vmatprep.subr.mxu0 0.0
    %573 = vmatpush1.msra.mxu0 0.0
    %574 = vmatprep.subr.mxu0 0.0
    %575 = vmatpush1.msra.mxu0 0.0
    %576 = vmatprep.subr.mxu0 0.0
    %577 = vmatpush1.msra.mxu0 0.0
    %578 = vmatprep.subr.mxu0 0.0
    %579 = vmatpush1.msra.mxu0 0.0
    %580 = vmatprep.mubr.f32.mxu0 0.0
    %581 = vmatmul.mubr.f32.gmra.mrb[0].mxu0 %v454
    %v582 = vpop.f32.mrb[0].mxu0
    %v583 = vadd.f32 0.0, %v582
    %v584 = vpop.f32.mrb[0].mxu0
    %585 = vmatprep.mubr.f32.mxu0 0.0
    %586 = vmatmul.mubr.f32.gmra.mrb[0].mxu0 %v455
    %v587 = vpop.f32.mrb[0].mxu0
    %v588 = vadd.f32 0.0, %v587
    %v589 = vpop.f32.mrb[0].mxu0
    %590 = vmatprep.mubr.f32.mxu0 0.0
    %591 = vmatmul.mubr.f32.gmra.mrb[0].mxu0 %v456
    %v592 = vpop.f32.mrb[0].mxu0
    %v593 = vadd.f32 0.0, %v592
    %v594 = vpop.f32.mrb[0].mxu0
    %595 = vmatprep.mubr.f32.mxu0 0.0
    %596 = vmatmul.mubr.f32.gmra.mrb[0].mxu0 %v457
    %v597 = vpop.f32.mrb[0].mxu0
    %v598 = vadd.f32 0.0, %v597
    %v599 = vpop.f32.mrb[0].mxu0
    %600 = vdwg.mxu0
    %601 = vmatprep.subr.mxu0 0.0
    %602 = vmatpush1.msra.mxu0 %v483
    %603 = vmatprep.subr.mxu0 0.0
    %604 = vmatpush1.msra.mxu0 %v484
    %605 = vmatprep.subr.mxu0 0.0
    %606 = vmatpush1.msra.mxu0 %v485
    %607 = vmatprep.subr.mxu0 0.0
    %608 = vmatpush1.msra.mxu0 %v486
    %609 = vmatprep.subr.mxu0 0.0
    %610 = vmatpush1.msra.mxu0 %v487
    %611 = vmatprep.subr.mxu0 0.0
    %612 = vmatpush1.msra.mxu0 %v488
    %613 = vmatprep.subr.mxu0 0.0
    %614 = vmatpush1.msra.mxu0 %v489
    %615 = vmatprep.subr.mxu0 0.0
    %616 = vmatpush1.msra.mxu0 %v490
    %617 = vmatprep.subr.mxu0 0.0
    %618 = vmatpush1.msra.mxu0 %v491
    %619 = vmatprep.subr.mxu0 0.0
    %620 = vmatpush1.msra.mxu0 %v492
    %621 = vmatprep.subr.mxu0 0.0
    %622 = vmatpush1.msra.mxu0 %v493
    %623 = vmatprep.subr.mxu0 0.0
    %624 = vmatpush1.msra.mxu0 %v494
    %625 = vmatprep.subr.mxu0 0.0
    %626 = vmatpush1.msra.mxu0 %v495
    %627 = vmatprep.subr.mxu0 0.0
    %628 = vmatpush1.msra.mxu0 %v496
    %629 = vmatprep.subr.mxu0 0.0
    %630 = vmatpush1.msra.mxu0 %v497
    %631 = vmatprep.subr.mxu0 0.0
    %632 = vmatpush1.msra.mxu0 %v498
    %633 = vmatprep.subr.mxu0 0.0
    %634 = vmatpush1.msra.mxu0 0.0
    %635 = vmatprep.subr.mxu0 0.0
    %636 = vmatpush1.msra.mxu0 0.0
    %637 = vmatprep.subr.mxu0 0.0
    %638 = vmatpush1.msra.mxu0 0.0
    %639 = vmatprep.subr.mxu0 0.0
    %640 = vmatpush1.msra.mxu0 0.0
    %641 = vmatprep.subr.mxu0 0.0
    %642 = vmatpush1.msra.mxu0 0.0
    %643 = vmatprep.subr.mxu0 0.0
    %644 = vmatpush1.msra.mxu0 0.0
    %645 = vmatprep.subr.mxu0 0.0
    %646 = vmatpush1.msra.mxu0 0.0
    %647 = vmatprep.subr.mxu0 0.0
    %648 = vmatpush1.msra.mxu0 0.0
    %649 = vmatprep.subr.mxu0 0.0
    %650 = vmatpush1.msra.mxu0 0.0
    %651 = vmatprep.subr.mxu0 0.0
    %652 = vmatpush1.msra.mxu0 0.0
    %653 = vmatprep.subr.mxu0 0.0
    %654 = vmatpush1.msra.mxu0 0.0
    %655 = vmatprep.subr.mxu0 0.0
    %656 = vmatpush1.msra.mxu0 0.0
    %657 = vmatprep.subr.mxu0 0.0
    %658 = vmatpush1.msra.mxu0 0.0
    %659 = vmatprep.subr.mxu0 0.0
    %660 = vmatpush1.msra.mxu0 0.0
    %661 = vmatprep.subr.mxu0 0.0
    %662 = vmatpush1.msra.mxu0 0.0
    %663 = vmatprep.subr.mxu0 0.0
    %664 = vmatpush1.msra.mxu0 0.0
    %665 = vmatprep.mubr.f32.mxu0 0.0
    %666 = vmatmul.mubr.f32.gmra.mrb[0].mxu0 %v466
    %v667 = vpop.f32.mrb[0].mxu0
    %v668 = vadd.f32 %v583, %v667
    %v669 = vpop.f32.mrb[0].mxu0
    %670 = vmatprep.mubr.f32.mxu0 0.0
    %671 = vmatmul.mubr.f32.gmra.mrb[0].mxu0 %v467
    %v672 = vpop.f32.mrb[0].mxu0
    %v673 = vadd.f32 %v588, %v672
    %v674 = vpop.f32.mrb[0].mxu0
    %675 = vmatprep.mubr.f32.mxu0 0.0
    %676 = vmatmul.mubr.f32.gmra.mrb[0].mxu0 %v468
    %v677 = vpop.f32.mrb[0].mxu0
    %v678 = vadd.f32 %v593, %v677
    %v679 = vpop.f32.mrb[0].mxu0
    %680 = vmatprep.mubr.f32.mxu0 0.0
    %681 = vmatmul.mubr.f32.gmra.mrb[0].mxu0 %v469
    %v682 = vpop.f32.mrb[0].mxu0
    %v683 = vadd.f32 %v598, %v682
    %v684 = vpop.f32.mrb[0].mxu0
    %685 = vdwg.mxu0
    %s686 = scalar_lea.vmem [#allocation5], 640
    %v687 = vld [vmem:[%s686] sm:$0xff]
    %v688 = vld [vmem:[%s686 + $0x8] sm:$0xff]
    %v689 = vld [vmem:[%s686 + $0x10] sm:$0xff]
    %v690 = vld [vmem:[%s686 + $0x18] sm:$0xff]
    %v691 = vld [vmem:[%s686 + $0x20] sm:$0xff]
    %v692 = vld [vmem:[%s686 + $0x28] sm:$0xff]
    %v693 = vld [vmem:[%s686 + $0x30] sm:$0xff]
    %v694 = vld [vmem:[%s686 + $0x38] sm:$0xff]
    %v695 = vld [vmem:[%s686 + $0x40] sm:$0xff]
    %v696 = vld [vmem:[%s686 + $0x48] sm:$0xff]
    %v697 = vld [vmem:[%s686 + $0x50] sm:$0xff]
    %v698 = vld [vmem:[%s686 + $0x58] sm:$0xff]
    %v699 = vld [vmem:[%s686 + $0x60] sm:$0xff]
    %v700 = vld [vmem:[%s686 + $0x68] sm:$0xff]
    %v701 = vld [vmem:[%s686 + $0x70] sm:$0xff]
    %v702 = vld [vmem:[%s686 + $0x78] sm:$0xff]
    %703 = vmatprep.subr.mxu0 0.0
    %704 = vmatpush1.msra.mxu0 %v687
    %705 = vmatprep.subr.mxu0 0.0
    %706 = vmatpush1.msra.mxu0 %v688
    %707 = vmatprep.subr.mxu0 0.0
    %708 = vmatpush1.msra.mxu0 %v689
    %709 = vmatprep.subr.mxu0 0.0
    %710 = vmatpush1.msra.mxu0 %v690
    %711 = vmatprep.subr.mxu0 0.0
    %712 = vmatpush1.msra.mxu0 %v691
    %713 = vmatprep.subr.mxu0 0.0
    %714 = vmatpush1.msra.mxu0 %v692
    %715 = vmatprep.subr.mxu0 0.0
    %716 = vmatpush1.msra.mxu0 %v693
    %717 = vmatprep.subr.mxu0 0.0
    %718 = vmatpush1.msra.mxu0 %v694
    %719 = vmatprep.subr.mxu0 0.0
    %720 = vmatpush1.msra.mxu0 %v695
    %721 = vmatprep.subr.mxu0 0.0
    %722 = vmatpush1.msra.mxu0 %v696
    %723 = vmatprep.subr.mxu0 0.0
    %724 = vmatpush1.msra.mxu0 %v697
    %725 = vmatprep.subr.mxu0 0.0
    %726 = vmatpush1.msra.mxu0 %v698
    %727 = vmatprep.subr.mxu0 0.0
    %728 = vmatpush1.msra.mxu0 %v699
    %729 = vmatprep.subr.mxu0 0.0
    %730 = vmatpush1.msra.mxu0 %v700
    %731 = vmatprep.subr.mxu0 0.0
    %732 = vmatpush1.msra.mxu0 %v701
    %733 = vmatprep.subr.mxu0 0.0
    %734 = vmatpush1.msra.mxu0 %v702
    %735 = vmatprep.subr.mxu0 0.0
    %736 = vmatpush1.msra.mxu0 0.0
    %737 = vmatprep.subr.mxu0 0.0
    %738 = vmatpush1.msra.mxu0 0.0
    %739 = vmatprep.subr.mxu0 0.0
    %740 = vmatpush1.msra.mxu0 0.0
    %741 = vmatprep.subr.mxu0 0.0
    %742 = vmatpush1.msra.mxu0 0.0
    %743 = vmatprep.subr.mxu0 0.0
    %744 = vmatpush1.msra.mxu0 0.0
    %745 = vmatprep.subr.mxu0 0.0
    %746 = vmatpush1.msra.mxu0 0.0
    %747 = vmatprep.subr.mxu0 0.0
    %748 = vmatpush1.msra.mxu0 0.0
    %749 = vmatprep.subr.mxu0 0.0
    %750 = vmatpush1.msra.mxu0 0.0
    %751 = vmatprep.subr.mxu0 0.0
    %752 = vmatpush1.msra.mxu0 0.0
    %753 = vmatprep.subr.mxu0 0.0
    %754 = vmatpush1.msra.mxu0 0.0
    %755 = vmatprep.subr.mxu0 0.0
    %756 = vmatpush1.msra.mxu0 0.0
    %757 = vmatprep.subr.mxu0 0.0
    %758 = vmatpush1.msra.mxu0 0.0
    %759 = vmatprep.subr.mxu0 0.0
    %760 = vmatpush1.msra.mxu0 0.0
    %761 = vmatprep.subr.mxu0 0.0
    %762 = vmatpush1.msra.mxu0 0.0
    %763 = vmatprep.subr.mxu0 0.0
    %764 = vmatpush1.msra.mxu0 0.0
    %765 = vmatprep.subr.mxu0 0.0
    %766 = vmatpush1.msra.mxu0 0.0
    %767 = vmatprep.mubr.f32.mxu0 0.0
    %768 = vmatmul.mubr.f32.gmra.mrb[0].mxu0 %v478
    %v769 = vpop.f32.mrb[0].mxu0
    %v770 = vadd.f32 0.0, %v769
    %v771 = vpop.f32.mrb[0].mxu0
    %772 = vmatprep.mubr.f32.mxu0 0.0
    %773 = vmatmul.mubr.f32.gmra.mrb[0].mxu0 %v479
    %v774 = vpop.f32.mrb[0].mxu0
    %v775 = vadd.f32 0.0, %v774
    %v776 = vpop.f32.mrb[0].mxu0
    %777 = vmatprep.mubr.f32.mxu0 0.0
    %778 = vmatmul.mubr.f32.gmra.mrb[0].mxu0 %v480
    %v779 = vpop.f32.mrb[0].mxu0
    %v780 = vadd.f32 0.0, %v779
    %v781 = vpop.f32.mrb[0].mxu0
    %782 = vmatprep.mubr.f32.mxu0 0.0
    %783 = vmatmul.mubr.f32.gmra.mrb[0].mxu0 %v481
    %v784 = vpop.f32.mrb[0].mxu0
    %v785 = vadd.f32 0.0, %v784
    %v786 = vpop.f32.mrb[0].mxu0
    %787 = vdwg.mxu0
    %v788 = vadd.f32 %v668, %v770
    %v789 = vadd.f32 %v673, %v775
    %v790 = vadd.f32 %v678, %v780
    %v791 = vadd.f32 %v683, %v785
    %s792 = scalar_lea.vmem %s2, 1
    %v793 = vld [vmem:[%s792] sm:$0x1]
    %v795 = vlaneseq
    %v796 = vshrl.u32 %v795, 7
    %v797 = vsub.s32 0, %v796
    %v798 = vrot.slane %v793, %v797
    %v800 = vadd.f32 %v788, %v798
    %v801 = vadd.f32 %v789, %v798
    %v802 = vadd.f32 %v790, %v798
    %v803 = vadd.f32 %v791, %v798
    %v804 = vadd.f32 %v800, %v43
    %v805 = vadd.f32 %v801, %v44
    %v806 = vadd.f32 %v802, %v45
    %v807 = vadd.f32 %v803, %v46
    %v808 = vrot.slane %v804, 7
    %v809 = vrot.slane %v805, 7
    %v810 = vrot.slane %v806, 7
    %v811 = vrot.slane %v807, 7
    %v812 = vsel %vm112, %v810, %v811
    %v813 = vsel %vm112, %v809, %v810
    %v814 = vsel %vm112, %v808, %v809
    %v815 = vsel %vm112, %v811, %v808
    %v816 = vsel %vm100, %v815, 0.0
    %v817 = vsel %vm101, %v814, 0.0
    %v818 = vsel %vm102, %v813, 0.0
    %v819 = vsel %vm103, %v812, 0.0
    %v820 = vrot.slane %v804, 1
    %v821 = vrot.slane %v805, 1
    %v822 = vrot.slane %v806, 1
    %v823 = vrot.slane %v807, 1
    %v824 = vsel %vm125, %v822, %v823
    %v825 = vsel %vm125, %v821, %v822
    %v826 = vsel %vm125, %v820, %v821
    %v827 = vsel %vm125, %v823, %v820
    %v828 = vsel %vm104, %v826, 0.0
    %v829 = vsel %vm105, %v825, 0.0
    %v830 = vsel %vm106, %v824, 0.0
    %v831 = vsel %vm107, %v827, 0.0
    %s832 = scalar_lea.vmem [#allocation5], 768
    %v833 = vld [vmem:[%s832] sm:$0xff]
    %v834 = vld [vmem:[%s832 + $0x8] sm:$0xff]
    %v835 = vld [vmem:[%s832 + $0x10] sm:$0xff]
    %v836 = vld [vmem:[%s832 + $0x18] sm:$0xff]
    %v837 = vld [vmem:[%s832 + $0x20] sm:$0xff]
    %v838 = vld [vmem:[%s832 + $0x28] sm:$0xff]
    %v839 = vld [vmem:[%s832 + $0x30] sm:$0xff]
    %v840 = vld [vmem:[%s832 + $0x38] sm:$0xff]
    %v841 = vld [vmem:[%s832 + $0x40] sm:$0xff]
    %v842 = vld [vmem:[%s832 + $0x48] sm:$0xff]
    %v843 = vld [vmem:[%s832 + $0x50] sm:$0xff]
    %v844 = vld [vmem:[%s832 + $0x58] sm:$0xff]
    %v845 = vld [vmem:[%s832 + $0x60] sm:$0xff]
    %v846 = vld [vmem:[%s832 + $0x68] sm:$0xff]
    %v847 = vld [vmem:[%s832 + $0x70] sm:$0xff]
    %v848 = vld [vmem:[%s832 + $0x78] sm:$0xff]
    %s849 = scalar_lea.vmem [#allocation5], 896
    %v850 = vld [vmem:[%s849] sm:$0xff]
    %v851 = vld [vmem:[%s849 + $0x8] sm:$0xff]
    %v852 = vld [vmem:[%s849 + $0x10] sm:$0xff]
    %v853 = vld [vmem:[%s849 + $0x18] sm:$0xff]
    %v854 = vld [vmem:[%s849 + $0x20] sm:$0xff]
    %v855 = vld [vmem:[%s849 + $0x28] sm:$0xff]
    %v856 = vld [vmem:[%s849 + $0x30] sm:$0xff]
    %v857 = vld [vmem:[%s849 + $0x38] sm:$0xff]
    %v858 = vld [vmem:[%s849 + $0x40] sm:$0xff]
    %v859 = vld [vmem:[%s849 + $0x48] sm:$0xff]
    %v860 = vld [vmem:[%s849 + $0x50] sm:$0xff]
    %v861 = vld [vmem:[%s849 + $0x58] sm:$0xff]
    %v862 = vld [vmem:[%s849 + $0x60] sm:$0xff]
    %v863 = vld [vmem:[%s849 + $0x68] sm:$0xff]
    %v864 = vld [vmem:[%s849 + $0x70] sm:$0xff]
    %v865 = vld [vmem:[%s849 + $0x78] sm:$0xff]
    %866 = vmatprep.subr.mxu0 0.0
    %867 = vmatpush1.msra.mxu0 %v850
    %868 = vmatprep.subr.mxu0 0.0
    %869 = vmatpush1.msra.mxu0 %v851
    %870 = vmatprep.subr.mxu0 0.0
    %871 = vmatpush1.msra.mxu0 %v852
    %872 = vmatprep.subr.mxu0 0.0
    %873 = vmatpush1.msra.mxu0 %v853
    %874 = vmatprep.subr.mxu0 0.0
    %875 = vmatpush1.msra.mxu0 %v854
    %876 = vmatprep.subr.mxu0 0.0
    %877 = vmatpush1.msra.mxu0 %v855
    %878 = vmatprep.subr.mxu0 0.0
    %879 = vmatpush1.msra.mxu0 %v856
    %880 = vmatprep.subr.mxu0 0.0
    %881 = vmatpush1.msra.mxu0 %v857
    %882 = vmatprep.subr.mxu0 0.0
    %883 = vmatpush1.msra.mxu0 %v858
    %884 = vmatprep.subr.mxu0 0.0
    %885 = vmatpush1.msra.mxu0 %v859
    %886 = vmatprep.subr.mxu0 0.0
    %887 = vmatpush1.msra.mxu0 %v860
    %888 = vmatprep.subr.mxu0 0.0
    %889 = vmatpush1.msra.mxu0 %v861
    %890 = vmatprep.subr.mxu0 0.0
    %891 = vmatpush1.msra.mxu0 %v862
    %892 = vmatprep.subr.mxu0 0.0
    %893 = vmatpush1.msra.mxu0 %v863
    %894 = vmatprep.subr.mxu0 0.0
    %895 = vmatpush1.msra.mxu0 %v864
    %896 = vmatprep.subr.mxu0 0.0
    %897 = vmatpush1.msra.mxu0 %v865
    %898 = vmatprep.subr.mxu0 0.0
    %899 = vmatpush1.msra.mxu0 0.0
    %900 = vmatprep.subr.mxu0 0.0
    %901 = vmatpush1.msra.mxu0 0.0
    %902 = vmatprep.subr.mxu0 0.0
    %903 = vmatpush1.msra.mxu0 0.0
    %904 = vmatprep.subr.mxu0 0.0
    %905 = vmatpush1.msra.mxu0 0.0
    %906 = vmatprep.subr.mxu0 0.0
    %907 = vmatpush1.msra.mxu0 0.0
    %908 = vmatprep.subr.mxu0 0.0
    %909 = vmatpush1.msra.mxu0 0.0
    %910 = vmatprep.subr.mxu0 0.0
    %911 = vmatpush1.msra.mxu0 0.0
    %912 = vmatprep.subr.mxu0 0.0
    %913 = vmatpush1.msra.mxu0 0.0
    %914 = vmatprep.subr.mxu0 0.0
    %915 = vmatpush1.msra.mxu0 0.0
    %916 = vmatprep.subr.mxu0 0.0
    %917 = vmatpush1.msra.mxu0 0.0
    %918 = vmatprep.subr.mxu0 0.0
    %919 = vmatpush1.msra.mxu0 0.0
    %920 = vmatprep.subr.mxu0 0.0
    %921 = vmatpush1.msra.mxu0 0.0
    %922 = vmatprep.subr.mxu0 0.0
    %923 = vmatpush1.msra.mxu0 0.0
    %924 = vmatprep.subr.mxu0 0.0
    %925 = vmatpush1.msra.mxu0 0.0
    %926 = vmatprep.subr.mxu0 0.0
    %927 = vmatpush1.msra.mxu0 0.0
    %928 = vmatprep.subr.mxu0 0.0
    %929 = vmatpush1.msra.mxu0 0.0
    %930 = vmatprep.mubr.f32.mxu0 0.0
    %931 = vmatmul.mubr.f32.gmra.mrb[0].mxu0 %v804
    %v932 = vpop.f32.mrb[0].mxu0
    %v933 = vadd.f32 0.0, %v932
    %v934 = vpop.f32.mrb[0].mxu0
    %935 = vmatprep.mubr.f32.mxu0 0.0
    %936 = vmatmul.mubr.f32.gmra.mrb[0].mxu0 %v805
    %v937 = vpop.f32.mrb[0].mxu0
    %v938 = vadd.f32 0.0, %v937
    %v939 = vpop.f32.mrb[0].mxu0
    %940 = vmatprep.mubr.f32.mxu0 0.0
    %941 = vmatmul.mubr.f32.gmra.mrb[0].mxu0 %v806
    %v942 = vpop.f32.mrb[0].mxu0
    %v943 = vadd.f32 0.0, %v942
    %v944 = vpop.f32.mrb[0].mxu0
    %945 = vmatprep.mubr.f32.mxu0 0.0
    %946 = vmatmul.mubr.f32.gmra.mrb[0].mxu0 %v807
    %v947 = vpop.f32.mrb[0].mxu0
    %v948 = vadd.f32 0.0, %v947
    %v949 = vpop.f32.mrb[0].mxu0
    %950 = vdwg.mxu0
    %951 = vmatprep.subr.mxu0 0.0
    %952 = vmatpush1.msra.mxu0 %v833
    %953 = vmatprep.subr.mxu0 0.0
    %954 = vmatpush1.msra.mxu0 %v834
    %955 = vmatprep.subr.mxu0 0.0
    %956 = vmatpush1.msra.mxu0 %v835
    %957 = vmatprep.subr.mxu0 0.0
    %958 = vmatpush1.msra.mxu0 %v836
    %959 = vmatprep.subr.mxu0 0.0
    %960 = vmatpush1.msra.mxu0 %v837
    %961 = vmatprep.subr.mxu0 0.0
    %962 = vmatpush1.msra.mxu0 %v838
    %963 = vmatprep.subr.mxu0 0.0
    %964 = vmatpush1.msra.mxu0 %v839
    %965 = vmatprep.subr.mxu0 0.0
    %966 = vmatpush1.msra.mxu0 %v840
    %967 = vmatprep.subr.mxu0 0.0
    %968 = vmatpush1.msra.mxu0 %v841
    %969 = vmatprep.subr.mxu0 0.0
    %970 = vmatpush1.msra.mxu0 %v842
    %971 = vmatprep.subr.mxu0 0.0
    %972 = vmatpush1.msra.mxu0 %v843
    %973 = vmatprep.subr.mxu0 0.0
    %974 = vmatpush1.msra.mxu0 %v844
    %975 = vmatprep.subr.mxu0 0.0
    %976 = vmatpush1.msra.mxu0 %v845
    %977 = vmatprep.subr.mxu0 0.0
    %978 = vmatpush1.msra.mxu0 %v846
    %979 = vmatprep.subr.mxu0 0.0
    %980 = vmatpush1.msra.mxu0 %v847
    %981 = vmatprep.subr.mxu0 0.0
    %982 = vmatpush1.msra.mxu0 %v848
    %983 = vmatprep.subr.mxu0 0.0
    %984 = vmatpush1.msra.mxu0 0.0
    %985 = vmatprep.subr.mxu0 0.0
    %986 = vmatpush1.msra.mxu0 0.0
    %987 = vmatprep.subr.mxu0 0.0
    %988 = vmatpush1.msra.mxu0 0.0
    %989 = vmatprep.subr.mxu0 0.0
    %990 = vmatpush1.msra.mxu0 0.0
    %991 = vmatprep.subr.mxu0 0.0
    %992 = vmatpush1.msra.mxu0 0.0
    %993 = vmatprep.subr.mxu0 0.0
    %994 = vmatpush1.msra.mxu0 0.0
    %995 = vmatprep.subr.mxu0 0.0
    %996 = vmatpush1.msra.mxu0 0.0
    %997 = vmatprep.subr.mxu0 0.0
    %998 = vmatpush1.msra.mxu0 0.0
    %999 = vmatprep.subr.mxu0 0.0
    %1000 = vmatpush1.msra.mxu0 0.0
    %1001 = vmatprep.subr.mxu0 0.0
    %1002 = vmatpush1.msra.mxu0 0.0
    %1003 = vmatprep.subr.mxu0 0.0
    %1004 = vmatpush1.msra.mxu0 0.0
    %1005 = vmatprep.subr.mxu0 0.0
    %1006 = vmatpush1.msra.mxu0 0.0
    %1007 = vmatprep.subr.mxu0 0.0
    %1008 = vmatpush1.msra.mxu0 0.0
    %1009 = vmatprep.subr.mxu0 0.0
    %1010 = vmatpush1.msra.mxu0 0.0
    %1011 = vmatprep.subr.mxu0 0.0
    %1012 = vmatpush1.msra.mxu0 0.0
    %1013 = vmatprep.subr.mxu0 0.0
    %1014 = vmatpush1.msra.mxu0 0.0
    %1015 = vmatprep.mubr.f32.mxu0 0.0
    %1016 = vmatmul.mubr.f32.gmra.mrb[0].mxu0 %v816
    %v1017 = vpop.f32.mrb[0].mxu0
    %v1018 = vadd.f32 %v933, %v1017
    %v1019 = vpop.f32.mrb[0].mxu0
    %1020 = vmatprep.mubr.f32.mxu0 0.0
    %1021 = vmatmul.mubr.f32.gmra.mrb[0].mxu0 %v817
    %v1022 = vpop.f32.mrb[0].mxu0
    %v1023 = vadd.f32 %v938, %v1022
    %v1024 = vpop.f32.mrb[0].mxu0
    %1025 = vmatprep.mubr.f32.mxu0 0.0
    %1026 = vmatmul.mubr.f32.gmra.mrb[0].mxu0 %v818
    %v1027 = vpop.f32.mrb[0].mxu0
    %v1028 = vadd.f32 %v943, %v1027
    %v1029 = vpop.f32.mrb[0].mxu0
    %1030 = vmatprep.mubr.f32.mxu0 0.0
    %1031 = vmatmul.mubr.f32.gmra.mrb[0].mxu0 %v819
    %v1032 = vpop.f32.mrb[0].mxu0
    %v1033 = vadd.f32 %v948, %v1032
    %v1034 = vpop.f32.mrb[0].mxu0
    %1035 = vdwg.mxu0
    %s1036 = scalar_lea.vmem [#allocation5], 1024
    %v1037 = vld [vmem:[%s1036] sm:$0xff]
    %v1038 = vld [vmem:[%s1036 + $0x8] sm:$0xff]
    %v1039 = vld [vmem:[%s1036 + $0x10] sm:$0xff]
    %v1040 = vld [vmem:[%s1036 + $0x18] sm:$0xff]
    %v1041 = vld [vmem:[%s1036 + $0x20] sm:$0xff]
    %v1042 = vld [vmem:[%s1036 + $0x28] sm:$0xff]
    %v1043 = vld [vmem:[%s1036 + $0x30] sm:$0xff]
    %v1044 = vld [vmem:[%s1036 + $0x38] sm:$0xff]
    %v1045 = vld [vmem:[%s1036 + $0x40] sm:$0xff]
    %v1046 = vld [vmem:[%s1036 + $0x48] sm:$0xff]
    %v1047 = vld [vmem:[%s1036 + $0x50] sm:$0xff]
    %v1048 = vld [vmem:[%s1036 + $0x58] sm:$0xff]
    %v1049 = vld [vmem:[%s1036 + $0x60] sm:$0xff]
    %v1050 = vld [vmem:[%s1036 + $0x68] sm:$0xff]
    %v1051 = vld [vmem:[%s1036 + $0x70] sm:$0xff]
    %v1052 = vld [vmem:[%s1036 + $0x78] sm:$0xff]
    %1053 = vmatprep.subr.mxu0 0.0
    %1054 = vmatpush1.msra.mxu0 %v1037
    %1055 = vmatprep.subr.mxu0 0.0
    %1056 = vmatpush1.msra.mxu0 %v1038
    %1057 = vmatprep.subr.mxu0 0.0
    %1058 = vmatpush1.msra.mxu0 %v1039
    %1059 = vmatprep.subr.mxu0 0.0
    %1060 = vmatpush1.msra.mxu0 %v1040
    %1061 = vmatprep.subr.mxu0 0.0
    %1062 = vmatpush1.msra.mxu0 %v1041
    %1063 = vmatprep.subr.mxu0 0.0
    %1064 = vmatpush1.msra.mxu0 %v1042
    %1065 = vmatprep.subr.mxu0 0.0
    %1066 = vmatpush1.msra.mxu0 %v1043
    %1067 = vmatprep.subr.mxu0 0.0
    %1068 = vmatpush1.msra.mxu0 %v1044
    %1069 = vmatprep.subr.mxu0 0.0
    %1070 = vmatpush1.msra.mxu0 %v1045
    %1071 = vmatprep.subr.mxu0 0.0
    %1072 = vmatpush1.msra.mxu0 %v1046
    %1073 = vmatprep.subr.mxu0 0.0
    %1074 = vmatpush1.msra.mxu0 %v1047
    %1075 = vmatprep.subr.mxu0 0.0
    %1076 = vmatpush1.msra.mxu0 %v1048
    %1077 = vmatprep.subr.mxu0 0.0
    %1078 = vmatpush1.msra.mxu0 %v1049
    %1079 = vmatprep.subr.mxu0 0.0
    %1080 = vmatpush1.msra.mxu0 %v1050
    %1081 = vmatprep.subr.mxu0 0.0
    %1082 = vmatpush1.msra.mxu0 %v1051
    %1083 = vmatprep.subr.mxu0 0.0
    %1084 = vmatpush1.msra.mxu0 %v1052
    %1085 = vmatprep.subr.mxu0 0.0
    %1086 = vmatpush1.msra.mxu0 0.0
    %1087 = vmatprep.subr.mxu0 0.0
    %1088 = vmatpush1.msra.mxu0 0.0
    %1089 = vmatprep.subr.mxu0 0.0
    %1090 = vmatpush1.msra.mxu0 0.0
    %1091 = vmatprep.subr.mxu0 0.0
    %1092 = vmatpush1.msra.mxu0 0.0
    %1093 = vmatprep.subr.mxu0 0.0
    %1094 = vmatpush1.msra.mxu0 0.0
    %1095 = vmatprep.subr.mxu0 0.0
    %1096 = vmatpush1.msra.mxu0 0.0
    %1097 = vmatprep.subr.mxu0 0.0
    %1098 = vmatpush1.msra.mxu0 0.0
    %1099 = vmatprep.subr.mxu0 0.0
    %1100 = vmatpush1.msra.mxu0 0.0
    %1101 = vmatprep.subr.mxu0 0.0
    %1102 = vmatpush1.msra.mxu0 0.0
    %1103 = vmatprep.subr.mxu0 0.0
    %1104 = vmatpush1.msra.mxu0 0.0
    %1105 = vmatprep.subr.mxu0 0.0
    %1106 = vmatpush1.msra.mxu0 0.0
    %1107 = vmatprep.subr.mxu0 0.0
    %1108 = vmatpush1.msra.mxu0 0.0
    %1109 = vmatprep.subr.mxu0 0.0
    %1110 = vmatpush1.msra.mxu0 0.0
    %1111 = vmatprep.subr.mxu0 0.0
    %1112 = vmatpush1.msra.mxu0 0.0
    %1113 = vmatprep.subr.mxu0 0.0
    %1114 = vmatpush1.msra.mxu0 0.0
    %1115 = vmatprep.subr.mxu0 0.0
    %1116 = vmatpush1.msra.mxu0 0.0
    %1117 = vmatprep.mubr.f32.mxu0 0.0
    %1118 = vmatmul.mubr.f32.gmra.mrb[0].mxu0 %v828
    %v1119 = vpop.f32.mrb[0].mxu0
    %v1120 = vadd.f32 0.0, %v1119
    %v1121 = vpop.f32.mrb[0].mxu0
    %1122 = vmatprep.mubr.f32.mxu0 0.0
    %1123 = vmatmul.mubr.f32.gmra.mrb[0].mxu0 %v829
    %v1124 = vpop.f32.mrb[0].mxu0
    %v1125 = vadd.f32 0.0, %v1124
    %v1126 = vpop.f32.mrb[0].mxu0
    %1127 = vmatprep.mubr.f32.mxu0 0.0
    %1128 = vmatmul.mubr.f32.gmra.mrb[0].mxu0 %v830
    %v1129 = vpop.f32.mrb[0].mxu0
    %v1130 = vadd.f32 0.0, %v1129
    %v1131 = vpop.f32.mrb[0].mxu0
    %1132 = vmatprep.mubr.f32.mxu0 0.0
    %1133 = vmatmul.mubr.f32.gmra.mrb[0].mxu0 %v831
    %v1134 = vpop.f32.mrb[0].mxu0
    %v1135 = vadd.f32 0.0, %v1134
    %v1136 = vpop.f32.mrb[0].mxu0
    %1137 = vdwg.mxu0
    %v1138 = vadd.f32 %v1018, %v1120
    %v1139 = vadd.f32 %v1023, %v1125
    %v1140 = vadd.f32 %v1028, %v1130
    %v1141 = vadd.f32 %v1033, %v1135
    %s1142 = scalar_lea.vmem %s2, 2
    %v1143 = vld [vmem:[%s1142] sm:$0x1]
    %v1145 = vlaneseq
    %v1146 = vshrl.u32 %v1145, 7
    %v1147 = vsub.s32 0, %v1146
    %v1148 = vrot.slane %v1143, %v1147
    %v1150 = vadd.f32 %v1138, %v1148
    %v1151 = vadd.f32 %v1139, %v1148
    %v1152 = vadd.f32 %v1140, %v1148
    %v1153 = vadd.f32 %v1141, %v1148
    %v1154 = vmax.f32 %v1150, 0.0
    %v1155 = vmax.f32 %v1151, 0.0
    %v1156 = vmax.f32 %v1152, 0.0
    %v1157 = vmax.f32 %v1153, 0.0
    %v1158 = vrot.slane %v1154, 7
    %v1159 = vrot.slane %v1155, 7
    %v1160 = vrot.slane %v1156, 7
    %v1161 = vrot.slane %v1157, 7
    %v1162 = vsel %vm112, %v1160, %v1161
    %v1163 = vsel %vm112, %v1159, %v1160
    %v1164 = vsel %vm112, %v1158, %v1159
    %v1165 = vsel %vm112, %v1161, %v1158
    %v1166 = vsel %vm100, %v1165, 0.0
    %v1167 = vsel %vm101, %v1164, 0.0
    %v1168 = vsel %vm102, %v1163, 0.0
    %v1169 = vsel %vm103, %v1162, 0.0
    %v1170 = vrot.slane %v1154, 1
    %v1171 = vrot.slane %v1155, 1
    %v1172 = vrot.slane %v1156, 1
    %v1173 = vrot.slane %v1157, 1
    %v1174 = vsel %vm125, %v1172, %v1173
    %v1175 = vsel %vm125, %v1171, %v1172
    %v1176 = vsel %vm125, %v1170, %v1171
    %v1177 = vsel %vm125, %v1173, %v1170
    %v1178 = vsel %vm104, %v1176, 0.0
    %v1179 = vsel %vm105, %v1175, 0.0
    %v1180 = vsel %vm106, %v1174, 0.0
    %v1181 = vsel %vm107, %v1177, 0.0
    %s1182 = scalar_lea.vmem [#allocation5], 1152
    %v1183 = vld [vmem:[%s1182] sm:$0xff]
    %v1184 = vld [vmem:[%s1182 + $0x8] sm:$0xff]
    %v1185 = vld [vmem:[%s1182 + $0x10] sm:$0xff]
    %v1186 = vld [vmem:[%s1182 + $0x18] sm:$0xff]
    %v1187 = vld [vmem:[%s1182 + $0x20] sm:$0xff]
    %v1188 = vld [vmem:[%s1182 + $0x28] sm:$0xff]
    %v1189 = vld [vmem:[%s1182 + $0x30] sm:$0xff]
    %v1190 = vld [vmem:[%s1182 + $0x38] sm:$0xff]
    %v1191 = vld [vmem:[%s1182 + $0x40] sm:$0xff]
    %v1192 = vld [vmem:[%s1182 + $0x48] sm:$0xff]
    %v1193 = vld [vmem:[%s1182 + $0x50] sm:$0xff]
    %v1194 = vld [vmem:[%s1182 + $0x58] sm:$0xff]
    %v1195 = vld [vmem:[%s1182 + $0x60] sm:$0xff]
    %v1196 = vld [vmem:[%s1182 + $0x68] sm:$0xff]
    %v1197 = vld [vmem:[%s1182 + $0x70] sm:$0xff]
    %v1198 = vld [vmem:[%s1182 + $0x78] sm:$0xff]
    %s1199 = scalar_lea.vmem [#allocation5], 1280
    %v1200 = vld [vmem:[%s1199] sm:$0xff]
    %v1201 = vld [vmem:[%s1199 + $0x8] sm:$0xff]
    %v1202 = vld [vmem:[%s1199 + $0x10] sm:$0xff]
    %v1203 = vld [vmem:[%s1199 + $0x18] sm:$0xff]
    %v1204 = vld [vmem:[%s1199 + $0x20] sm:$0xff]
    %v1205 = vld [vmem:[%s1199 + $0x28] sm:$0xff]
    %v1206 = vld [vmem:[%s1199 + $0x30] sm:$0xff]
    %v1207 = vld [vmem:[%s1199 + $0x38] sm:$0xff]
    %v1208 = vld [vmem:[%s1199 + $0x40] sm:$0xff]
    %v1209 = vld [vmem:[%s1199 + $0x48] sm:$0xff]
    %v1210 = vld [vmem:[%s1199 + $0x50] sm:$0xff]
    %v1211 = vld [vmem:[%s1199 + $0x58] sm:$0xff]
    %v1212 = vld [vmem:[%s1199 + $0x60] sm:$0xff]
    %v1213 = vld [vmem:[%s1199 + $0x68] sm:$0xff]
    %v1214 = vld [vmem:[%s1199 + $0x70] sm:$0xff]
    %v1215 = vld [vmem:[%s1199 + $0x78] sm:$0xff]
    %1216 = vmatprep.subr.mxu0 0.0
    %1217 = vmatpush1.msra.mxu0 %v1200
    %1218 = vmatprep.subr.mxu0 0.0
    %1219 = vmatpush1.msra.mxu0 %v1201
    %1220 = vmatprep.subr.mxu0 0.0
    %1221 = vmatpush1.msra.mxu0 %v1202
    %1222 = vmatprep.subr.mxu0 0.0
    %1223 = vmatpush1.msra.mxu0 %v1203
    %1224 = vmatprep.subr.mxu0 0.0
    %1225 = vmatpush1.msra.mxu0 %v1204
    %1226 = vmatprep.subr.mxu0 0.0
    %1227 = vmatpush1.msra.mxu0 %v1205
    %1228 = vmatprep.subr.mxu0 0.0
    %1229 = vmatpush1.msra.mxu0 %v1206
    %1230 = vmatprep.subr.mxu0 0.0
    %1231 = vmatpush1.msra.mxu0 %v1207
    %1232 = vmatprep.subr.mxu0 0.0
    %1233 = vmatpush1.msra.mxu0 %v1208
    %1234 = vmatprep.subr.mxu0 0.0
    %1235 = vmatpush1.msra.mxu0 %v1209
    %1236 = vmatprep.subr.mxu0 0.0
    %1237 = vmatpush1.msra.mxu0 %v1210
    %1238 = vmatprep.subr.mxu0 0.0
    %1239 = vmatpush1.msra.mxu0 %v1211
    %1240 = vmatprep.subr.mxu0 0.0
    %1241 = vmatpush1.msra.mxu0 %v1212
    %1242 = vmatprep.subr.mxu0 0.0
    %1243 = vmatpush1.msra.mxu0 %v1213
    %1244 = vmatprep.subr.mxu0 0.0
    %1245 = vmatpush1.msra.mxu0 %v1214
    %1246 = vmatprep.subr.mxu0 0.0
    %1247 = vmatpush1.msra.mxu0 %v1215
    %1248 = vmatprep.subr.mxu0 0.0
    %1249 = vmatpush1.msra.mxu0 0.0
    %1250 = vmatprep.subr.mxu0 0.0
    %1251 = vmatpush1.msra.mxu0 0.0
    %1252 = vmatprep.subr.mxu0 0.0
    %1253 = vmatpush1.msra.mxu0 0.0
    %1254 = vmatprep.subr.mxu0 0.0
    %1255 = vmatpush1.msra.mxu0 0.0
    %1256 = vmatprep.subr.mxu0 0.0
    %1257 = vmatpush1.msra.mxu0 0.0
    %1258 = vmatprep.subr.mxu0 0.0
    %1259 = vmatpush1.msra.mxu0 0.0
    %1260 = vmatprep.subr.mxu0 0.0
    %1261 = vmatpush1.msra.mxu0 0.0
    %1262 = vmatprep.subr.mxu0 0.0
    %1263 = vmatpush1.msra.mxu0 0.0
    %1264 = vmatprep.subr.mxu0 0.0
    %1265 = vmatpush1.msra.mxu0 0.0
    %1266 = vmatprep.subr.mxu0 0.0
    %1267 = vmatpush1.msra.mxu0 0.0
    %1268 = vmatprep.subr.mxu0 0.0
    %1269 = vmatpush1.msra.mxu0 0.0
    %1270 = vmatprep.subr.mxu0 0.0
    %1271 = vmatpush1.msra.mxu0 0.0
    %1272 = vmatprep.subr.mxu0 0.0
    %1273 = vmatpush1.msra.mxu0 0.0
    %1274 = vmatprep.subr.mxu0 0.0
    %1275 = vmatpush1.msra.mxu0 0.0
    %1276 = vmatprep.subr.mxu0 0.0
    %1277 = vmatpush1.msra.mxu0 0.0
    %1278 = vmatprep.subr.mxu0 0.0
    %1279 = vmatpush1.msra.mxu0 0.0
    %1280 = vmatprep.mubr.f32.mxu0 0.0
    %1281 = vmatmul.mubr.f32.gmra.mrb[0].mxu0 %v1154
    %v1282 = vpop.f32.mrb[0].mxu0
    %v1283 = vadd.f32 0.0, %v1282
    %v1284 = vpop.f32.mrb[0].mxu0
    %1285 = vmatprep.mubr.f32.mxu0 0.0
    %1286 = vmatmul.mubr.f32.gmra.mrb[0].mxu0 %v1155
    %v1287 = vpop.f32.mrb[0].mxu0
    %v1288 = vadd.f32 0.0, %v1287
    %v1289 = vpop.f32.mrb[0].mxu0
    %1290 = vmatprep.mubr.f32.mxu0 0.0
    %1291 = vmatmul.mubr.f32.gmra.mrb[0].mxu0 %v1156
    %v1292 = vpop.f32.mrb[0].mxu0
    %v1293 = vadd.f32 0.0, %v1292
    %v1294 = vpop.f32.mrb[0].mxu0
    %1295 = vmatprep.mubr.f32.mxu0 0.0
    %1296 = vmatmul.mubr.f32.gmra.mrb[0].mxu0 %v1157
    %v1297 = vpop.f32.mrb[0].mxu0
    %v1298 = vadd.f32 0.0, %v1297
    %v1299 = vpop.f32.mrb[0].mxu0
    %1300 = vdwg.mxu0
    %1301 = vmatprep.subr.mxu0 0.0
    %1302 = vmatpush1.msra.mxu0 %v1183
    %1303 = vmatprep.subr.mxu0 0.0
    %1304 = vmatpush1.msra.mxu0 %v1184
    %1305 = vmatprep.subr.mxu0 0.0
    %1306 = vmatpush1.msra.mxu0 %v1185
    %1307 = vmatprep.subr.mxu0 0.0
    %1308 = vmatpush1.msra.mxu0 %v1186
    %1309 = vmatprep.subr.mxu0 0.0
    %1310 = vmatpush1.msra.mxu0 %v1187
    %1311 = vmatprep.subr.mxu0 0.0
    %1312 = vmatpush1.msra.mxu0 %v1188
    %1313 = vmatprep.subr.mxu0 0.0
    %1314 = vmatpush1.msra.mxu0 %v1189
    %1315 = vmatprep.subr.mxu0 0.0
    %1316 = vmatpush1.msra.mxu0 %v1190
    %1317 = vmatprep.subr.mxu0 0.0
    %1318 = vmatpush1.msra.mxu0 %v1191
    %1319 = vmatprep.subr.mxu0 0.0
    %1320 = vmatpush1.msra.mxu0 %v1192
    %1321 = vmatprep.subr.mxu0 0.0
    %1322 = vmatpush1.msra.mxu0 %v1193
    %1323 = vmatprep.subr.mxu0 0.0
    %1324 = vmatpush1.msra.mxu0 %v1194
    %1325 = vmatprep.subr.mxu0 0.0
    %1326 = vmatpush1.msra.mxu0 %v1195
    %1327 = vmatprep.subr.mxu0 0.0
    %1328 = vmatpush1.msra.mxu0 %v1196
    %1329 = vmatprep.subr.mxu0 0.0
    %1330 = vmatpush1.msra.mxu0 %v1197
    %1331 = vmatprep.subr.mxu0 0.0
    %1332 = vmatpush1.msra.mxu0 %v1198
    %1333 = vmatprep.subr.mxu0 0.0
    %1334 = vmatpush1.msra.mxu0 0.0
    %1335 = vmatprep.subr.mxu0 0.0
    %1336 = vmatpush1.msra.mxu0 0.0
    %1337 = vmatprep.subr.mxu0 0.0
    %1338 = vmatpush1.msra.mxu0 0.0
    %1339 = vmatprep.subr.mxu0 0.0
    %1340 = vmatpush1.msra.mxu0 0.0
    %1341 = vmatprep.subr.mxu0 0.0
    %1342 = vmatpush1.msra.mxu0 0.0
    %1343 = vmatprep.subr.mxu0 0.0
    %1344 = vmatpush1.msra.mxu0 0.0
    %1345 = vmatprep.subr.mxu0 0.0
    %1346 = vmatpush1.msra.mxu0 0.0
    %1347 = vmatprep.subr.mxu0 0.0
    %1348 = vmatpush1.msra.mxu0 0.0
    %1349 = vmatprep.subr.mxu0 0.0
    %1350 = vmatpush1.msra.mxu0 0.0
    %1351 = vmatprep.subr.mxu0 0.0
    %1352 = vmatpush1.msra.mxu0 0.0
    %1353 = vmatprep.subr.mxu0 0.0
    %1354 = vmatpush1.msra.mxu0 0.0
    %1355 = vmatprep.subr.mxu0 0.0
    %1356 = vmatpush1.msra.mxu0 0.0
    %1357 = vmatprep.subr.mxu0 0.0
    %1358 = vmatpush1.msra.mxu0 0.0
    %1359 = vmatprep.subr.mxu0 0.0
    %1360 = vmatpush1.msra.mxu0 0.0
    %1361 = vmatprep.subr.mxu0 0.0
    %1362 = vmatpush1.msra.mxu0 0.0
    %1363 = vmatprep.subr.mxu0 0.0
    %1364 = vmatpush1.msra.mxu0 0.0
    %1365 = vmatprep.mubr.f32.mxu0 0.0
    %1366 = vmatmul.mubr.f32.gmra.mrb[0].mxu0 %v1166
    %v1367 = vpop.f32.mrb[0].mxu0
    %v1368 = vadd.f32 %v1283, %v1367
    %v1369 = vpop.f32.mrb[0].mxu0
    %1370 = vmatprep.mubr.f32.mxu0 0.0
    %1371 = vmatmul.mubr.f32.gmra.mrb[0].mxu0 %v1167
    %v1372 = vpop.f32.mrb[0].mxu0
    %v1373 = vadd.f32 %v1288, %v1372
    %v1374 = vpop.f32.mrb[0].mxu0
    %1375 = vmatprep.mubr.f32.mxu0 0.0
    %1376 = vmatmul.mubr.f32.gmra.mrb[0].mxu0 %v1168
    %v1377 = vpop.f32.mrb[0].mxu0
    %v1378 = vadd.f32 %v1293, %v1377
    %v1379 = vpop.f32.mrb[0].mxu0
    %1380 = vmatprep.mubr.f32.mxu0 0.0
    %1381 = vmatmul.mubr.f32.gmra.mrb[0].mxu0 %v1169
    %v1382 = vpop.f32.mrb[0].mxu0
    %v1383 = vadd.f32 %v1298, %v1382
    %v1384 = vpop.f32.mrb[0].mxu0
    %1385 = vdwg.mxu0
    %s1386 = scalar_lea.vmem [#allocation5], 1408
    %v1387 = vld [vmem:[%s1386] sm:$0xff]
    %v1388 = vld [vmem:[%s1386 + $0x8] sm:$0xff]
    %v1389 = vld [vmem:[%s1386 + $0x10] sm:$0xff]
    %v1390 = vld [vmem:[%s1386 + $0x18] sm:$0xff]
    %v1391 = vld [vmem:[%s1386 + $0x20] sm:$0xff]
    %v1392 = vld [vmem:[%s1386 + $0x28] sm:$0xff]
    %v1393 = vld [vmem:[%s1386 + $0x30] sm:$0xff]
    %v1394 = vld [vmem:[%s1386 + $0x38] sm:$0xff]
    %v1395 = vld [vmem:[%s1386 + $0x40] sm:$0xff]
    %v1396 = vld [vmem:[%s1386 + $0x48] sm:$0xff]
    %v1397 = vld [vmem:[%s1386 + $0x50] sm:$0xff]
    %v1398 = vld [vmem:[%s1386 + $0x58] sm:$0xff]
    %v1399 = vld [vmem:[%s1386 + $0x60] sm:$0xff]
    %v1400 = vld [vmem:[%s1386 + $0x68] sm:$0xff]
    %v1401 = vld [vmem:[%s1386 + $0x70] sm:$0xff]
    %v1402 = vld [vmem:[%s1386 + $0x78] sm:$0xff]
    %1403 = vmatprep.subr.mxu0 0.0
    %1404 = vmatpush1.msra.mxu0 %v1387
    %1405 = vmatprep.subr.mxu0 0.0
    %1406 = vmatpush1.msra.mxu0 %v1388
    %1407 = vmatprep.subr.mxu0 0.0
    %1408 = vmatpush1.msra.mxu0 %v1389
    %1409 = vmatprep.subr.mxu0 0.0
    %1410 = vmatpush1.msra.mxu0 %v1390
    %1411 = vmatprep.subr.mxu0 0.0
    %1412 = vmatpush1.msra.mxu0 %v1391
    %1413 = vmatprep.subr.mxu0 0.0
    %1414 = vmatpush1.msra.mxu0 %v1392
    %1415 = vmatprep.subr.mxu0 0.0
    %1416 = vmatpush1.msra.mxu0 %v1393
    %1417 = vmatprep.subr.mxu0 0.0
    %1418 = vmatpush1.msra.mxu0 %v1394
    %1419 = vmatprep.subr.mxu0 0.0
    %1420 = vmatpush1.msra.mxu0 %v1395
    %1421 = vmatprep.subr.mxu0 0.0
    %1422 = vmatpush1.msra.mxu0 %v1396
    %1423 = vmatprep.subr.mxu0 0.0
    %1424 = vmatpush1.msra.mxu0 %v1397
    %1425 = vmatprep.subr.mxu0 0.0
    %1426 = vmatpush1.msra.mxu0 %v1398
    %1427 = vmatprep.subr.mxu0 0.0
    %1428 = vmatpush1.msra.mxu0 %v1399
    %1429 = vmatprep.subr.mxu0 0.0
    %1430 = vmatpush1.msra.mxu0 %v1400
    %1431 = vmatprep.subr.mxu0 0.0
    %1432 = vmatpush1.msra.mxu0 %v1401
    %1433 = vmatprep.subr.mxu0 0.0
    %1434 = vmatpush1.msra.mxu0 %v1402
    %1435 = vmatprep.subr.mxu0 0.0
    %1436 = vmatpush1.msra.mxu0 0.0
    %1437 = vmatprep.subr.mxu0 0.0
    %1438 = vmatpush1.msra.mxu0 0.0
    %1439 = vmatprep.subr.mxu0 0.0
    %1440 = vmatpush1.msra.mxu0 0.0
    %1441 = vmatprep.subr.mxu0 0.0
    %1442 = vmatpush1.msra.mxu0 0.0
    %1443 = vmatprep.subr.mxu0 0.0
    %1444 = vmatpush1.msra.mxu0 0.0
    %1445 = vmatprep.subr.mxu0 0.0
    %1446 = vmatpush1.msra.mxu0 0.0
    %1447 = vmatprep.subr.mxu0 0.0
    %1448 = vmatpush1.msra.mxu0 0.0
    %1449 = vmatprep.subr.mxu0 0.0
    %1450 = vmatpush1.msra.mxu0 0.0
    %1451 = vmatprep.subr.mxu0 0.0
    %1452 = vmatpush1.msra.mxu0 0.0
    %1453 = vmatprep.subr.mxu0 0.0
    %1454 = vmatpush1.msra.mxu0 0.0
    %1455 = vmatprep.subr.mxu0 0.0
    %1456 = vmatpush1.msra.mxu0 0.0
    %1457 = vmatprep.subr.mxu0 0.0
    %1458 = vmatpush1.msra.mxu0 0.0
    %1459 = vmatprep.subr.mxu0 0.0
    %1460 = vmatpush1.msra.mxu0 0.0
    %1461 = vmatprep.subr.mxu0 0.0
    %1462 = vmatpush1.msra.mxu0 0.0
    %1463 = vmatprep.subr.mxu0 0.0
    %1464 = vmatpush1.msra.mxu0 0.0
    %1465 = vmatprep.subr.mxu0 0.0
    %1466 = vmatpush1.msra.mxu0 0.0
    %1467 = vmatprep.mubr.f32.mxu0 0.0
    %1468 = vmatmul.mubr.f32.gmra.mrb[0].mxu0 %v1178
    %v1469 = vpop.f32.mrb[0].mxu0
    %v1470 = vadd.f32 0.0, %v1469
    %v1471 = vpop.f32.mrb[0].mxu0
    %1472 = vmatprep.mubr.f32.mxu0 0.0
    %1473 = vmatmul.mubr.f32.gmra.mrb[0].mxu0 %v1179
    %v1474 = vpop.f32.mrb[0].mxu0
    %v1475 = vadd.f32 0.0, %v1474
    %v1476 = vpop.f32.mrb[0].mxu0
    %1477 = vmatprep.mubr.f32.mxu0 0.0
    %1478 = vmatmul.mubr.f32.gmra.mrb[0].mxu0 %v1180
    %v1479 = vpop.f32.mrb[0].mxu0
    %v1480 = vadd.f32 0.0, %v1479
    %v1481 = vpop.f32.mrb[0].mxu0
    %1482 = vmatprep.mubr.f32.mxu0 0.0
    %1483 = vmatmul.mubr.f32.gmra.mrb[0].mxu0 %v1181
    %v1484 = vpop.f32.mrb[0].mxu0
    %v1485 = vadd.f32 0.0, %v1484
    %v1486 = vpop.f32.mrb[0].mxu0
    %1487 = vdwg.mxu0
    %v1488 = vadd.f32 %v1368, %v1470
    %v1489 = vadd.f32 %v1373, %v1475
    %v1490 = vadd.f32 %v1378, %v1480
    %v1491 = vadd.f32 %v1383, %v1485
    %s1492 = scalar_lea.vmem %s2, 3
    %v1493 = vld [vmem:[%s1492] sm:$0x1]
    %v1495 = vlaneseq
    %v1496 = vshrl.u32 %v1495, 7
    %v1497 = vsub.s32 0, %v1496
    %v1498 = vrot.slane %v1493, %v1497
    %v1500 = vadd.f32 %v1488, %v1498
    %v1501 = vadd.f32 %v1489, %v1498
    %v1502 = vadd.f32 %v1490, %v1498
    %v1503 = vadd.f32 %v1491, %v1498
    %v1504 = vadd.f32 %v1500, %v804
    %v1505 = vadd.f32 %v1501, %v805
    %v1506 = vadd.f32 %v1502, %v806
    %v1507 = vadd.f32 %v1503, %v807
    %1508 = vst [vmem:[#allocation7] sm:$0xff] %v1504
    %1509 = vst [vmem:[#allocation7 + $0x8] sm:$0xff] %v1505
    %1510 = vst [vmem:[#allocation7 + $0x10] sm:$0xff] %v1506
    %1511 = vst [vmem:[#allocation7 + $0x18] sm:$0xff] %v1507
    // Predicated region
    $region22: #{tpu_custom_call.1} parent=1 // pred_check
      _
    $region23: #{tpu_custom_call.1} parent=1 // pred_check_branch
      %1513 = sbr.rel (0) target = $region25
    $region24: #{tpu_custom_call.1} parent=1 // pred_region
      %s1515 = ssub.s32 512, 512
      %1516 = vsyncadd [#allocation4], %s1515
      %s1517 = sshll.u32 [#allocation7], 4
      %s1518 = int_to_ptr.vmem [resolvable:$true] %s1517
      %1523 = dma.vmem_to_hbm [thread:$0]  %s1518, 512, %s3, [#allocation4], 128, 128, 8
    $region25: #{tpu_custom_call.1} parent=1 // pred_fallthru
      _
    // Predicated region
    $region26: #{tpu_custom_call.1} parent=1 // pred_check
      _
    $region27: #{tpu_custom_call.1} parent=1 // pred_check_branch
      %1525 = sbr.rel (0) target = $region29
    $region28: #{tpu_custom_call.1} parent=1 // pred_region
      %1526 = dma.done [#allocation4], 512
    $region29: #{tpu_custom_call.1} parent=1 // pred_fallthru
      _
    %1527 = vsyncpa [#allocation3], 1
    %1528 = vsyncpa [#allocation6], 1
    %1529 = vsyncpa [#allocation4], 1

</llo_original>
